<compile_context>
chip_gen: v7x
topology: tpu7x:2x2x1
jax: 0.10.0
libtpu: 0.0.40
codegen_flags: <defaults>
</compile_context>

<pallas_src>
import functools
import math

import jax
import jax.numpy as jnp
from jax.experimental import pallas as pl
from jax.experimental.pallas import tpu as pltpu


def _round_up(x, m):
    return (x + m - 1) // m * m


def _vmem_capacity_bytes():
    # Generation-aware VMEM capacity (v7x: 64 MiB per TensorCore, v5e/v6e: 128 MiB).
    try:
        return int(pltpu.get_tpu_info().vmem_capacity_bytes)
    except Exception:  # pragma: no cover - conservative fallback (v7x per-core size)
        return 64 * 1024 * 1024


# ---------------------------------------------------------------------------
# Pallas kernel: in-kernel im2col (flat shifted lane slices) + fused gating.
# ---------------------------------------------------------------------------
def _make_gated_conv_kernel(kh, kw, stride, dilation, wp, m_out, cout_p):
    taps = tuple((i, j) for i in range(kh) for j in range(kw))

    def kernel(x_ref, w_ref, o_ref):
        # x_ref: (Cin, L_slab)           bf16  flat zero-padded image, one batch elem
        # w_ref: (kh*kw, 2*Cout_p, Cin)  bf16  per-tap [phi rows ; gate rows] weights
        # o_ref: (Cout_p, m_out)         out dtype, lane-dense flat gated output
        acc = None
        for t, (i, j) in enumerate(taps):
            off = i * dilation * wp + j * dilation          # static per-tap offset
            if stride == 1:
                xs = x_ref[:, pl.ds(off, m_out)]            # contiguous lane slice
            else:
                xs = x_ref[:, pl.ds(off, m_out, stride)]    # strided lane slice
            d = jnp.dot(w_ref[t], xs, preferred_element_type=jnp.float32)
            acc = d if acc is None else acc + d
        # Cout_p is a multiple of 8 -> phi/gate split is a free sublane-aligned slice.
        phi = acc[:cout_p, :]
        gate = acc[cout_p:, :]
        # NOTE: if the VALU ever binds (it does not — kernel is HBM-bound), the divide
        # inside sigmoid could move to the EUP via pl.reciprocal(..., approx=True).
        o_ref[...] = (jax.nn.sigmoid(gate) * jnp.maximum(phi, 0.0)).astype(o_ref.dtype)

    return kernel


# ---------------------------------------------------------------------------
# Wrapper: GatedConvolution.forward (type='2d', status='train')
# ---------------------------------------------------------------------------
def gated_convolution_2d(x_nchw, weight_oihw, *, stride=1, dilation=1, padding=0,
                         out_dtype=jnp.float32):
    """x_nchw: (N, Cin, H, W) f32.  weight_oihw: (2*Cout, Cin, kh, kw) f32.
    Returns sigmoid(gate) * relu(phi), NCHW, dtype out_dtype (default f32)."""
    n, cin, h, w = x_nchw.shape
    two_cout, cin_w, kh, kw = weight_oihw.shape
    assert cin == cin_w and two_cout % 2 == 0
    cout = two_cout // 2
    cout_p = _round_up(cout, 8)            # vreg-tile-aligned phi/gate split

    hp, wp = h + 2 * padding, w + 2 * padding
    oh = (hp - dilation * (kh - 1) - 1) // stride + 1
    ow = (wp - dilation * (kw - 1) - 1) // stride + 1
    m_out = oh * wp                        # flat output grid over the padded width
    # Flat input length so every tap slice stays in-bounds (garbage columns read the
    # zero pad / neighbouring rows and are cropped afterwards).
    l_need = stride * (m_out - 1) + dilation * (kh - 1) * wp + dilation * (kw - 1) + 1
    extra_rows = max(0, -(-(l_need - hp * wp) // wp))
    l_slab = (hp + extra_rows) * wp

    # ---- XLA prep (one small fused pass): cast to bf16 BEFORE padding/flattening ----
    xb = jnp.pad(x_nchw.astype(jnp.bfloat16),
                 ((0, 0), (0, 0), (padding, padding + extra_rows), (padding, padding)))
    xb = xb.reshape(n, cin, l_slab)
    # TODO(synk): for very large Cin*H*W, move the zero-padding into the kernel
    # (DMA raw NCHW rows + zero-initialised VMEM scratch) to drop this prep pass too.

    # Per-tap weight slabs (kh*kw, 2*Cout_p, Cin): phi rows first, then gate rows,
    # each zero-padded to Cout_p.  Padded rows produce sigmoid(0)*relu(0)=0.
    w_phi = jnp.transpose(weight_oihw[:cout], (2, 3, 0, 1)).reshape(kh * kw, cout, cin)
    w_gat = jnp.transpose(weight_oihw[cout:], (2, 3, 0, 1)).reshape(kh * kw, cout, cin)
    w_k = jnp.zeros((kh * kw, 2 * cout_p, cin), jnp.float32)
    w_k = w_k.at[:, :cout, :].set(w_phi).at[:, cout_p:cout_p + cout, :].set(w_gat)
    w_k = w_k.astype(jnp.bfloat16)

    # ---- VMEM accounting (ALL residents) against the chip's actual capacity ----
    out_itemsize = jnp.dtype(out_dtype).itemsize
    x_blk = cin * l_slab * 2
    w_blk = kh * kw * 2 * cout_p * cin * 2
    o_blk = cout_p * m_out * out_itemsize
    acc_b = 2 * cout_p * m_out * 4
    vmem_needed = 2 * x_blk + 2 * w_blk + 2 * o_blk + 2 * acc_b + (2 << 20)
    vmem_cap = _vmem_capacity_bytes()
    if vmem_needed > int(0.9 * vmem_cap):
        # TODO(synk): row-block tiling (halo'd input DMA via manual make_async_copy or
        # pl.Element blocks) + a K grid axis for huge images / channel counts.
        raise NotImplementedError(
            f"per-image working set {vmem_needed} B exceeds VMEM ({vmem_cap} B)")
    vmem_limit = min(int(0.9 * vmem_cap), max(32 << 20, 2 * vmem_needed))

    kernel = _make_gated_conv_kernel(kh, kw, stride, dilation, wp, m_out, cout_p)

    w_spec_kwargs = {}
    if w_blk > (1 << 20):
        # Constant index_map -> a second weight buffer would never be used; drop it.
        w_spec_kwargs["pipeline_mode"] = pl.Buffered(1)

    cost = pl.CostEstimate(
        flops=n * (2 * kh * kw * (2 * cout_p) * cin * m_out + 6 * cout_p * m_out),
        transcendentals=n * cout_p * m_out,
        bytes_accessed=n * x_blk + w_blk + n * o_blk)

    out_flat = pl.pallas_call(
        kernel,
        out_shape=jax.ShapeDtypeStruct((n, cout_p, m_out), out_dtype),
        grid_spec=pltpu.PrefetchScalarGridSpec(
            num_scalar_prefetch=0,
            grid=(n,),
            in_specs=[
                pl.BlockSpec((None, cin, l_slab), lambda b: (b, 0, 0)),
                pl.BlockSpec((kh * kw, 2 * cout_p, cin), lambda b: (0, 0, 0),
                             **w_spec_kwargs),
            ],
            out_specs=pl.BlockSpec((None, cout_p, m_out), lambda b: (b, 0, 0)),
        ),
        compiler_params=pltpu.CompilerParams(
            dimension_semantics=("parallel",),     # batch shards across v7x's 2 TCs
            allow_input_fusion=[True, False],      # fuse the cast+pad into the x operand
            vmem_limit_bytes=vmem_limit),
        cost_estimate=cost,
    )(xb, w_k)

    # Contiguous crop: drop the dilation*(kw-1) garbage columns per output row (and any
    # Cout padding).  This is the only post-kernel pass, over the (small) output stream.
    # TODO(synk): emitting (oh, ow) directly from the kernel would need either narrow
    # (ow-lane) masked stores or an in-kernel lane compaction; not worth it while HBM
    # input traffic dominates.
    out = out_flat.reshape(n, cout_p, oh, wp)[:, :cout, :, :ow]
    return out

    # TODO(synk): status='test' additionally returns sigmoid(gate); it is a second
    # out_ref written from the same `gate` tile (not a new kernel).
    # TODO(synk): bias=True would be a (2*Cout_p, 1) add after the tap accumulation.
    # TODO(synk): type='3d' (Conv3d) needs a kd tap loop + flat (D,H,W) padding.


# ---------------------------------------------------------------------------
# Pure-JAX reference of the PyTorch forward (for verification)
# ---------------------------------------------------------------------------
def _reference(x_nchw, weight_oihw, *, stride, dilation, padding):
    conv = jax.lax.conv_general_dilated(
        x_nchw, weight_oihw,
        window_strides=(stride, stride),
        padding=[(padding, padding), (padding, padding)],
        rhs_dilation=(dilation, dilation),
        dimension_numbers=("NCHW", "OIHW", "NCHW"))
    cout = weight_oihw.shape[0] // 2
    phi, gate = conv[:, :cout], conv[:, cout:]
    return jax.nn.sigmoid(gate) * jnp.maximum(phi, 0.0)


if __name__ == "__main__":
    # Module config: GatedConvolution(in_channels=4, out_channels=8, kernel_size=3,
    #                                 stride=1, padding=1, bias=False, type='2d',
    #                                 status='train')
    in_channels, out_channels = 4, 8
    kernel_size, stride, dilation, padding = 3, 1, 1, 1

    key = jax.random.PRNGKey(0)
    kx, kw_ = jax.random.split(key)

    x = jax.random.normal(kx, (2, in_channels, 16, 16), dtype=jnp.float32)

    fan_in = in_channels * kernel_size * kernel_size
    bound = 1.0 / math.sqrt(fan_in)
    weight = jax.random.uniform(
        kw_, (out_channels * 2, in_channels, kernel_size, kernel_size),
        minval=-bound, maxval=bound, dtype=jnp.float32)

    fwd = jax.jit(functools.partial(gated_convolution_2d, stride=stride,
                                    dilation=dilation, padding=padding))
    y = jax.block_until_ready(fwd(x, weight))

    # (a) bf16-faithful reference (mirrors bf16-input / f32-accumulate MXU path).
    x_bf = x.astype(jnp.bfloat16).astype(jnp.float32)
    w_bf = weight.astype(jnp.bfloat16).astype(jnp.float32)
    y_ref_bf16 = _reference(x_bf, w_bf, stride=stride, dilation=dilation,
                            padding=padding)
    # (b) full-f32 PyTorch-semantics reference.
    y_ref_f32 = _reference(x, weight, stride=stride, dilation=dilation,
                           padding=padding)

    assert y.shape == y_ref_f32.shape == (2, out_channels, 16, 16)
    assert jnp.allclose(y, y_ref_bf16, atol=1e-3, rtol=1e-3)
    assert jnp.allclose(y, y_ref_f32, atol=1e-2, rtol=1e-2)

    print("KERNEL_OK")
</pallas_src>

<mosaic_0001>
module attributes {stable_mosaic.version = 11 : i64} {
  func.func @kernel(%arg0: i32, %arg1: memref<1x4x342xbf16, #tpu.memory_space<vmem>>, %arg2: memref<9x16x4xbf16, #tpu.memory_space<vmem>>, %arg3: memref<1x8x288xf32, #tpu.memory_space<vmem>>) attributes {dimension_semantics = [#tpu.dimension_semantics<parallel>], iteration_bounds = array<i64: 2>, scalar_prefetch = 0 : i64, scratch_operands = 0 : i64, tpu.core_type = #tpu.core_type<tc>, window_params = [{transform_indices = @transform_0, window_bounds = array<i64: 1, 4, 342>}, {pipeline_mode = #tpu.pipeline_mode<synchronous>, transform_indices = @transform_1, window_bounds = array<i64: 9, 16, 4>}, {transform_indices = @transform_2, window_bounds = array<i64: 1, 8, 288>}]} {
    %c0 = arith.constant 0 : index
    %c0_0 = arith.constant 0 : index
    %c0_1 = arith.constant 0 : index
    %0 = vector.load %arg1[%c0, %c0_0, %c0_1] : memref<1x4x342xbf16, #tpu.memory_space<vmem>>, vector<1x4x288xbf16>
    %1 = vector.shape_cast %0 : vector<1x4x288xbf16> to vector<4x288xbf16>
    %c0_2 = arith.constant 0 : index
    %c0_3 = arith.constant 0 : index
    %c0_4 = arith.constant 0 : index
    %2 = vector.load %arg2[%c0_2, %c0_3, %c0_4] : memref<9x16x4xbf16, #tpu.memory_space<vmem>>, vector<1x16x4xbf16>
    %3 = vector.shape_cast %2 : vector<1x16x4xbf16> to vector<16x4xbf16>
    %cst = arith.constant dense<0.000000e+00> : vector<16x288xf32>
    %4 = tpu.matmul %3, %1, %cst {dimension_numbers = #tpu.dot_dimension_numbers<[1], [0], [0], [1], [0, 0, 1, 1], [], []>} : vector<16x4xbf16>, vector<4x288xbf16>, vector<16x288xf32> -> vector<16x288xf32>
    %c0_5 = arith.constant 0 : index
    %c0_6 = arith.constant 0 : index
    %c1 = arith.constant 1 : index
    %5 = vector.load %arg1[%c0_5, %c0_6, %c1] : memref<1x4x342xbf16, #tpu.memory_space<vmem>>, vector<1x4x288xbf16>
    %6 = vector.shape_cast %5 : vector<1x4x288xbf16> to vector<4x288xbf16>
    %c1_7 = arith.constant 1 : index
    %c0_8 = arith.constant 0 : index
    %c0_9 = arith.constant 0 : index
    %7 = vector.load %arg2[%c1_7, %c0_8, %c0_9] : memref<9x16x4xbf16, #tpu.memory_space<vmem>>, vector<1x16x4xbf16>
    %8 = vector.shape_cast %7 : vector<1x16x4xbf16> to vector<16x4xbf16>
    %cst_10 = arith.constant dense<0.000000e+00> : vector<16x288xf32>
    %9 = tpu.matmul %8, %6, %cst_10 {dimension_numbers = #tpu.dot_dimension_numbers<[1], [0], [0], [1], [0, 0, 1, 1], [], []>} : vector<16x4xbf16>, vector<4x288xbf16>, vector<16x288xf32> -> vector<16x288xf32>
    %10 = arith.addf %4, %9 : vector<16x288xf32>
    %c0_11 = arith.constant 0 : index
    %c0_12 = arith.constant 0 : index
    %c2 = arith.constant 2 : index
    %11 = vector.load %arg1[%c0_11, %c0_12, %c2] : memref<1x4x342xbf16, #tpu.memory_space<vmem>>, vector<1x4x288xbf16>
    %12 = vector.shape_cast %11 : vector<1x4x288xbf16> to vector<4x288xbf16>
    %c2_13 = arith.constant 2 : index
    %c0_14 = arith.constant 0 : index
    %c0_15 = arith.constant 0 : index
    %13 = vector.load %arg2[%c2_13, %c0_14, %c0_15] : memref<9x16x4xbf16, #tpu.memory_space<vmem>>, vector<1x16x4xbf16>
    %14 = vector.shape_cast %13 : vector<1x16x4xbf16> to vector<16x4xbf16>
    %cst_16 = arith.constant dense<0.000000e+00> : vector<16x288xf32>
    %15 = tpu.matmul %14, %12, %cst_16 {dimension_numbers = #tpu.dot_dimension_numbers<[1], [0], [0], [1], [0, 0, 1, 1], [], []>} : vector<16x4xbf16>, vector<4x288xbf16>, vector<16x288xf32> -> vector<16x288xf32>
    %16 = arith.addf %10, %15 : vector<16x288xf32>
    %c0_17 = arith.constant 0 : index
    %c0_18 = arith.constant 0 : index
    %c18 = arith.constant 18 : index
    %17 = vector.load %arg1[%c0_17, %c0_18, %c18] : memref<1x4x342xbf16, #tpu.memory_space<vmem>>, vector<1x4x288xbf16>
    %18 = vector.shape_cast %17 : vector<1x4x288xbf16> to vector<4x288xbf16>
    %c3 = arith.constant 3 : index
    %c0_19 = arith.constant 0 : index
    %c0_20 = arith.constant 0 : index
    %19 = vector.load %arg2[%c3, %c0_19, %c0_20] : memref<9x16x4xbf16, #tpu.memory_space<vmem>>, vector<1x16x4xbf16>
    %20 = vector.shape_cast %19 : vector<1x16x4xbf16> to vector<16x4xbf16>
    %cst_21 = arith.constant dense<0.000000e+00> : vector<16x288xf32>
    %21 = tpu.matmul %20, %18, %cst_21 {dimension_numbers = #tpu.dot_dimension_numbers<[1], [0], [0], [1], [0, 0, 1, 1], [], []>} : vector<16x4xbf16>, vector<4x288xbf16>, vector<16x288xf32> -> vector<16x288xf32>
    %22 = arith.addf %16, %21 : vector<16x288xf32>
    %c0_22 = arith.constant 0 : index
    %c0_23 = arith.constant 0 : index
    %c19 = arith.constant 19 : index
    %23 = vector.load %arg1[%c0_22, %c0_23, %c19] : memref<1x4x342xbf16, #tpu.memory_space<vmem>>, vector<1x4x288xbf16>
    %24 = vector.shape_cast %23 : vector<1x4x288xbf16> to vector<4x288xbf16>
    %c4 = arith.constant 4 : index
    %c0_24 = arith.constant 0 : index
    %c0_25 = arith.constant 0 : index
    %25 = vector.load %arg2[%c4, %c0_24, %c0_25] : memref<9x16x4xbf16, #tpu.memory_space<vmem>>, vector<1x16x4xbf16>
    %26 = vector.shape_cast %25 : vector<1x16x4xbf16> to vector<16x4xbf16>
    %cst_26 = arith.constant dense<0.000000e+00> : vector<16x288xf32>
    %27 = tpu.matmul %26, %24, %cst_26 {dimension_numbers = #tpu.dot_dimension_numbers<[1], [0], [0], [1], [0, 0, 1, 1], [], []>} : vector<16x4xbf16>, vector<4x288xbf16>, vector<16x288xf32> -> vector<16x288xf32>
    %28 = arith.addf %22, %27 : vector<16x288xf32>
    %c0_27 = arith.constant 0 : index
    %c0_28 = arith.constant 0 : index
    %c20 = arith.constant 20 : index
    %29 = vector.load %arg1[%c0_27, %c0_28, %c20] : memref<1x4x342xbf16, #tpu.memory_space<vmem>>, vector<1x4x288xbf16>
    %30 = vector.shape_cast %29 : vector<1x4x288xbf16> to vector<4x288xbf16>
    %c5 = arith.constant 5 : index
    %c0_29 = arith.constant 0 : index
    %c0_30 = arith.constant 0 : index
    %31 = vector.load %arg2[%c5, %c0_29, %c0_30] : memref<9x16x4xbf16, #tpu.memory_space<vmem>>, vector<1x16x4xbf16>
    %32 = vector.shape_cast %31 : vector<1x16x4xbf16> to vector<16x4xbf16>
    %cst_31 = arith.constant dense<0.000000e+00> : vector<16x288xf32>
    %33 = tpu.matmul %32, %30, %cst_31 {dimension_numbers = #tpu.dot_dimension_numbers<[1], [0], [0], [1], [0, 0, 1, 1], [], []>} : vector<16x4xbf16>, vector<4x288xbf16>, vector<16x288xf32> -> vector<16x288xf32>
    %34 = arith.addf %28, %33 : vector<16x288xf32>
    %c0_32 = arith.constant 0 : index
    %c0_33 = arith.constant 0 : index
    %c36 = arith.constant 36 : index
    %35 = vector.load %arg1[%c0_32, %c0_33, %c36] : memref<1x4x342xbf16, #tpu.memory_space<vmem>>, vector<1x4x288xbf16>
    %36 = vector.shape_cast %35 : vector<1x4x288xbf16> to vector<4x288xbf16>
    %c6 = arith.constant 6 : index
    %c0_34 = arith.constant 0 : index
    %c0_35 = arith.constant 0 : index
    %37 = vector.load %arg2[%c6, %c0_34, %c0_35] : memref<9x16x4xbf16, #tpu.memory_space<vmem>>, vector<1x16x4xbf16>
    %38 = vector.shape_cast %37 : vector<1x16x4xbf16> to vector<16x4xbf16>
    %cst_36 = arith.constant dense<0.000000e+00> : vector<16x288xf32>
    %39 = tpu.matmul %38, %36, %cst_36 {dimension_numbers = #tpu.dot_dimension_numbers<[1], [0], [0], [1], [0, 0, 1, 1], [], []>} : vector<16x4xbf16>, vector<4x288xbf16>, vector<16x288xf32> -> vector<16x288xf32>
    %40 = arith.addf %34, %39 : vector<16x288xf32>
    %c0_37 = arith.constant 0 : index
    %c0_38 = arith.constant 0 : index
    %c37 = arith.constant 37 : index
    %41 = vector.load %arg1[%c0_37, %c0_38, %c37] : memref<1x4x342xbf16, #tpu.memory_space<vmem>>, vector<1x4x288xbf16>
    %42 = vector.shape_cast %41 : vector<1x4x288xbf16> to vector<4x288xbf16>
    %c7 = arith.constant 7 : index
    %c0_39 = arith.constant 0 : index
    %c0_40 = arith.constant 0 : index
    %43 = vector.load %arg2[%c7, %c0_39, %c0_40] : memref<9x16x4xbf16, #tpu.memory_space<vmem>>, vector<1x16x4xbf16>
    %44 = vector.shape_cast %43 : vector<1x16x4xbf16> to vector<16x4xbf16>
    %cst_41 = arith.constant dense<0.000000e+00> : vector<16x288xf32>
    %45 = tpu.matmul %44, %42, %cst_41 {dimension_numbers = #tpu.dot_dimension_numbers<[1], [0], [0], [1], [0, 0, 1, 1], [], []>} : vector<16x4xbf16>, vector<4x288xbf16>, vector<16x288xf32> -> vector<16x288xf32>
    %46 = arith.addf %40, %45 : vector<16x288xf32>
    %c0_42 = arith.constant 0 : index
    %c0_43 = arith.constant 0 : index
    %c38 = arith.constant 38 : index
    %47 = vector.load %arg1[%c0_42, %c0_43, %c38] : memref<1x4x342xbf16, #tpu.memory_space<vmem>>, vector<1x4x288xbf16>
    %48 = vector.shape_cast %47 : vector<1x4x288xbf16> to vector<4x288xbf16>
    %c8 = arith.constant 8 : index
    %c0_44 = arith.constant 0 : index
    %c0_45 = arith.constant 0 : index
    %49 = vector.load %arg2[%c8, %c0_44, %c0_45] : memref<9x16x4xbf16, #tpu.memory_space<vmem>>, vector<1x16x4xbf16>
    %50 = vector.shape_cast %49 : vector<1x16x4xbf16> to vector<16x4xbf16>
    %cst_46 = arith.constant dense<0.000000e+00> : vector<16x288xf32>
    %51 = tpu.matmul %50, %48, %cst_46 {dimension_numbers = #tpu.dot_dimension_numbers<[1], [0], [0], [1], [0, 0, 1, 1], [], []>} : vector<16x4xbf16>, vector<4x288xbf16>, vector<16x288xf32> -> vector<16x288xf32>
    %52 = arith.addf %46, %51 : vector<16x288xf32>
    %53 = vector.extract_strided_slice %52 {offsets = [0, 0], sizes = [8, 288], strides = [1, 1]} : vector<16x288xf32> to vector<8x288xf32>
    %54 = vector.extract_strided_slice %52 {offsets = [8, 0], sizes = [8, 288], strides = [1, 1]} : vector<16x288xf32> to vector<8x288xf32>
    %55 = arith.negf %54 : vector<8x288xf32>
    %56 = math.exp %55 : vector<8x288xf32>
    %cst_47 = arith.constant 1.000000e+00 : f32
    %57 = vector.broadcast %cst_47 : f32 to vector<8x288xf32>
    %58 = arith.addf %57, %56 : vector<8x288xf32>
    %59 = arith.divf %57, %58 : vector<8x288xf32>
    %cst_48 = arith.constant 0.000000e+00 : f32
    %60 = vector.broadcast %cst_48 : f32 to vector<8x288xf32>
    %61 = arith.maximumf %53, %60 : vector<8x288xf32>
    %62 = arith.mulf %59, %61 : vector<8x288xf32>
    %c0_49 = arith.constant 0 : index
    %c0_50 = arith.constant 0 : index
    %c0_51 = arith.constant 0 : index
    %63 = vector.load %arg3[%c0_49, %c0_50, %c0_51] : memref<1x8x288xf32, #tpu.memory_space<vmem>>, vector<1x8x288xf32>
    %64 = vector.shape_cast %63 : vector<1x8x288xf32> to vector<8x288xf32>
    %65 = vector.shape_cast %62 : vector<8x288xf32> to vector<1x8x288xf32>
    tpu.vector_store %arg3[%c0_49, %c0_50, %c0_51], %65 {strides = array<i32>} : memref<1x8x288xf32, #tpu.memory_space<vmem>>, vector<1x8x288xf32>,
    return
  }
  func.func @transform_0(%arg0: i32) -> (i32, i32, i32) {
    %c0_i32 = arith.constant 0 : i32
    %c0_i32_0 = arith.constant 0 : i32
    %c0_i32_1 = arith.constant 0 : i32
    return %arg0, %c0_i32, %c0_i32_0 : i32, i32, i32
  }
  func.func @transform_1(%arg0: i32) -> (i32, i32, i32) {
    %c0_i32 = arith.constant 0 : i32
    %c0_i32_0 = arith.constant 0 : i32
    %c0_i32_1 = arith.constant 0 : i32
    %c0_i32_2 = arith.constant 0 : i32
    return %c0_i32, %c0_i32_0, %c0_i32_1 : i32, i32, i32
  }
  func.func @transform_2(%arg0: i32) -> (i32, i32, i32) {
    %c0_i32 = arith.constant 0 : i32
    %c0_i32_0 = arith.constant 0 : i32
    %c0_i32_1 = arith.constant 0 : i32
    return %arg0, %c0_i32, %c0_i32_0 : i32, i32, i32
  }
}

</mosaic_0001>

<llo_original>
// kernel: gated_convolution_2d.1
$region0: #{gated_convolution_2d.1}
  #allocation0 [shape = 'u32[]', space=smem, size = 0x4, offset = 0x4, fixed_abs, tag = 'smem constant byte address 0x4 - core index']
  #allocation1 [shape = 'u32[144,128]{1,0:T(1,128)}', space=vmem, size = 0x12000, scoped, tag = 'internal scratch']
  %s0 = inlined_call_operand.vmem [shape: bf16[2,4,342], index: 0, kind: input, shape index: {}]
  %s1 = inlined_call_operand.vmem [shape: bf16[9,16,4], index: 1, kind: input, shape index: {}]
  %s2 = inlined_call_operand.vmem [shape: f32[2,8,288], index: 2, kind: output, shape index: {}]
  %s3 = sld [smem:[#allocation0]]
  $region41: #{gated_convolution_2d.1} parent=0
    _
  %s5 = ssub.s32 1, %s3
  %s6 = scalar_select 0, %s5, %s3
  loop: start=0, step=1, limit=4
  $region2: #{gated_convolution_2d.1} parent=0 // loop_pre_header
    _
  $region3: #{gated_convolution_2d.1} parent=0 // loop_header
    %s8 = sphi 0, %s12
    %p9 = scmp.ge.s32.totalorder %s8, 4
    %s18 = sphi 0, %s20
    %s21 = sphi 0, %s18
    %s22 = sphi 0, %s21
    %s38 = sphi 0, %s22
    %s42 = sphi 0, %s42
    %s44 = sphi 0, %s42
    %s45 = sphi 0, %s44
    %s59 = sphi 0, %s45
    %s65 = sphi 0, %s67
    %s68 = sphi 0, %s65
    %s69 = sphi 0, %s68
    %s85 = sphi 0, %s69
  $region4: #{gated_convolution_2d.1} parent=0 // loop_header_branch
    %11 = sbr.rel (%p9) target = $region8
  $region5: #{gated_convolution_2d.1} parent=0 // loop_body
    %s13 = ssub.s32 %s8, 1
    %s14 = ssub.s32 %s8, 2
    %s15 = sadd.s32 %s8, 1
    %s16 = ssub.s32 %s8, %s15
    %p17 = scmp.eq.s32.totalorder %s16, 0
    %s19 = sadd.s32 %s18, 1
    %s20 = scalar_select %p17, %s18, %s19
    %p23 = pneg %p17
    %p24 = scmp.eq.s32.totalorder %s8, 1
    %p25 = por %p23, %p24
    %p26 = scmp.ne.s32.totalorder %s18, %s21
    %p27 = scmp.eq.s32.totalorder %s8, 0
    %p28 = por %p26, %p27
    %p29 = scmp.ne.s32.totalorder %s18, %s21
    %p30 = scmp.eq.s32.totalorder %s13, 1
    %p31 = por %p29, %p30
    %p32 = scmp.ne.s32.totalorder %s21, %s22
    %p33 = scmp.eq.s32.totalorder %s13, 0
    %p34 = por %p32, %p33
    %p35 = scmp.ne.s32.totalorder %s21, %s22
    %p36 = scmp.eq.s32.totalorder %s14, 1
    %p37 = por %p35, %p36
    %p39 = scmp.ne.s32.totalorder %s22, %s38
    %p40 = scmp.eq.s32.totalorder %s14, 0
    %p41 = por %p39, %p40
    %s43 = sadd.s32 %s42, 1
    %p46 = scmp.eq.s32.totalorder %s8, 1
    %p47 = scmp.ne.s32.totalorder %s42, %s44
    %p48 = scmp.eq.s32.totalorder %s8, 0
    %p49 = por %p47, %p48
    %p50 = scmp.ne.s32.totalorder %s42, %s44
    %p51 = scmp.eq.s32.totalorder %s13, 1
    %p52 = por %p50, %p51
    %p53 = scmp.ne.s32.totalorder %s44, %s45
    %p54 = scmp.eq.s32.totalorder %s13, 0
    %p55 = por %p53, %p54
    %p56 = scmp.ne.s32.totalorder %s44, %s45
    %p57 = scmp.eq.s32.totalorder %s14, 1
    %p58 = por %p56, %p57
    %p60 = scmp.ne.s32.totalorder %s45, %s59
    %p61 = scmp.eq.s32.totalorder %s14, 0
    %p62 = por %p60, %p61
    %s63 = ssub.s32 %s8, %s15
    %p64 = scmp.eq.s32.totalorder %s63, 0
    %s66 = sadd.s32 %s65, 1
    %s67 = scalar_select %p64, %s65, %s66
    %p70 = pneg %p64
    %p71 = scmp.eq.s32.totalorder %s8, 1
    %p72 = por %p70, %p71
    %p73 = scmp.ne.s32.totalorder %s65, %s68
    %p74 = scmp.eq.s32.totalorder %s8, 0
    %p75 = por %p73, %p74
    %p76 = scmp.ne.s32.totalorder %s65, %s68
    %p77 = scmp.eq.s32.totalorder %s13, 1
    %p78 = por %p76, %p77
    %p79 = scmp.ne.s32.totalorder %s68, %s69
    %p80 = scmp.eq.s32.totalorder %s13, 0
    %p81 = por %p79, %p80
    %p82 = scmp.ne.s32.totalorder %s68, %s69
    %p83 = scmp.eq.s32.totalorder %s14, 1
    %p84 = por %p82, %p83
    %p86 = scmp.ne.s32.totalorder %s69, %s85
    %p87 = scmp.eq.s32.totalorder %s14, 0
    %p88 = por %p86, %p87
    %p89 = scmp.le.s32.totalorder 1, %s8
    %p90 = scmp.lt.s32.totalorder %s8, 3
    %p91 = pnand %p89, %p90
    %p92 = pneg %p91
    // Predicated region
    $region9: #{gated_convolution_2d.1} parent=5 // pred_check
      _
    $region10: #{gated_convolution_2d.1} parent=5 // pred_check_branch
      %94 = sbr.rel (%p91) target = $region12
    $region11: #{gated_convolution_2d.1} parent=5 // pred_region
      %s95 = ssub.s32 %s8, 1
      // Predicated region
      $region13: #{gated_convolution_2d.1} parent=11 // pred_check
        %p96 = pneg %p55
      $region14: #{gated_convolution_2d.1} parent=11 // pred_check_branch
        %98 = sbr.rel (%p96) target = $region16
      $region15: #{gated_convolution_2d.1} parent=11 // pred_region
        _
      $region16: #{gated_convolution_2d.1} parent=11 // pred_fallthru
        _
    $region12: #{gated_convolution_2d.1} parent=5 // pred_fallthru
      _
    %p99 = scmp.lt.s32.totalorder %s8, 2
    // Predicated region
    $region17: #{gated_convolution_2d.1} parent=5 // pred_check
      %p100 = pneg %p99
    $region18: #{gated_convolution_2d.1} parent=5 // pred_check_branch
      %102 = sbr.rel (%p100) target = $region20
    $region19: #{gated_convolution_2d.1} parent=5 // pred_region
      // Predicated region
      $region21: #{gated_convolution_2d.1} parent=19 // pred_check
        %p103 = pneg %p28
      $region22: #{gated_convolution_2d.1} parent=19 // pred_check_branch
        %105 = sbr.rel (%p103) target = $region24
      $region23: #{gated_convolution_2d.1} parent=19 // pred_region
        %p106 = scmp.lt.s32.totalorder %s8, 1
        %s107 = scalar_select %p106, %s8, 1
        %s108 = smul.addr %s107, 3
        %s109 = smul.addr %s108, 2
        %s110 = scalar_lea.vmem %s0, %s109
      $region24: #{gated_convolution_2d.1} parent=19 // pred_fallthru
        _
    $region20: #{gated_convolution_2d.1} parent=5 // pred_fallthru
      _
    %p111 = scmp.le.s32.totalorder 1, %s8
    %p112 = scmp.lt.s32.totalorder %s8, 3
    %p113 = pnand %p111, %p112
    %p114 = pneg %p113
    // Predicated region
    $region25: #{gated_convolution_2d.1} parent=5 // pred_check
      _
    $region26: #{gated_convolution_2d.1} parent=5 // pred_check_branch
      %116 = sbr.rel (%p113) target = $region28
    $region27: #{gated_convolution_2d.1} parent=5 // pred_region
      %s117 = ssub.s32 %s8, 1
      %p118 = scmp.lt.s32.totalorder %s13, 1
      %s119 = scalar_select %p118, %s13, 1
      %s120 = smul.addr %s119, 3
      %s121 = smul.addr %s120, 2
      %s122 = scalar_lea.vmem %s0, %s121
      %p123 = pneg %p34
      %p124 = pneg %p31
      %p125 = pneg %p55
      %p126 = pneg %p52
      %p127 = pneg %p81
      %p128 = pneg %p78
      %p129 = scmp.lt.s32.totalorder %s13, 1
      %s130 = scalar_select %p129, %s13, 1
      %s131 = smul.addr %s130, 3
      %s132 = smul.addr %s131, 8
      %s133 = scalar_lea.vmem %s2, %s132
      %p134 = scmp.lt.s32.totalorder %s13, 1
      %s135 = scalar_select %p134, %s13, 1
      %s136 = smul.addr %s135, 3
      %s137 = smul.addr %s136, 2
      %s138 = scalar_lea.vmem %s0, %s137
      %p139 = scmp.lt.s32.totalorder %s13, 1
      %s140 = scalar_select %p139, %s13, 1
      %s141 = smul.addr %s140, 3
      %s142 = smul.addr %s141, 8
      %s143 = scalar_lea.vmem %s2, %s142
      %v145 = vld [vmem:[%s138] sm:$0x3f]
      %v146 = vld [vmem:[%s1] sm:$0xf]
      %v147 = vld [vmem:[%s1 + $0x4] sm:$0xf]
      %s148 = scalar_lea.vmem %s1, 8
      %v149 = vld [vmem:[%s148] sm:$0xf]
      %v150 = vld [vmem:[%s148 + $0x4] sm:$0xf]
      %v153 = vunpack.c.l.b16 %v149
      %v154 = vunpack.c.l.b16 %v150
      %v155 = vpack.c.b16 %v154, %v153
      %v157 = vcombine.high %v145, %v145
      %v159 = vunpack.c.l.s4 1983009808
      %v160 = vunpack.c.0.s8 %v159
      %v161 = vlaneseq
      %v162 = vshrl.u32 %v161, 7
      %v163 = vsub.s32 %v160, %v162
      %v164 = vrot.slane %v145, %v163
      %v166 = vunpack.c.l.s4 1983009808
      %v167 = vunpack.c.0.s8 %v166
      %v168 = vlaneseq
      %v169 = vshrl.u32 %v168, 7
      %v170 = vsub.s32 %v167, %v169
      %v171 = vrot.slane %v157, %v170
      %v172 = vcombine.high %v164, %v164
      %173 = vrot.lane.b32.xlu0 %v164, 127
      %v174 = vpop.permute.xlu0 %173
      %175 = vrot.lane.b32.xlu0 %v172, 127
      %v176 = vpop.permute.xlu0 %175
      %177 = vrot.lane.b32.xlu0 %v171, 127
      %v178 = vpop.permute.xlu0 %177
      %vm179 = vcmask 1039360
      %v180 = vsel %vm179, %v174, %v176
      %v181 = vsel %vm179, %v176, %v178
      %vm182 = vcmask 31744
      %v184 = vsel %vm182, %v155, 0
      %vm186 = vcmask 1041408
      %v188 = vsel %vm186, %v180, 0
      %v191 = vsel %vm186, %v181, 0
      %v194 = vsel %vm186, %v178, 0
      %196 = vmatprep.subr.bf16.mxu0 %v191
      %197 = vmatpush1.bf16.msra.mxu0 %v188
      %198 = vmatprep.subr.bf16.mxu0 0
      %199 = vmatpush1.bf16.msra.mxu0 0
      %200 = vmatprep.subr.bf16.mxu0 0
      %201 = vmatpush1.bf16.msra.mxu0 0
      %202 = vmatprep.subr.bf16.mxu0 0
      %203 = vmatpush1.bf16.msra.mxu0 0
      %204 = vmatprep.subr.bf16.mxu0 0
      %205 = vmatpush1.bf16.msra.mxu0 0
      %206 = vmatprep.subr.bf16.mxu0 0
      %207 = vmatpush1.bf16.msra.mxu0 0
      %208 = vmatprep.subr.bf16.mxu0 0
      %209 = vmatpush1.bf16.msra.mxu0 0
      %210 = vmatprep.subr.bf16.mxu0 0
      %211 = vmatpush1.bf16.msra.mxu0 0
      %212 = vmatprep.subr.bf16.mxu0 0
      %213 = vmatpush1.bf16.msra.mxu0 0
      %214 = vmatprep.subr.bf16.mxu0 0
      %215 = vmatpush1.bf16.msra.mxu0 0
      %216 = vmatprep.subr.bf16.mxu0 0
      %217 = vmatpush1.bf16.msra.mxu0 0
      %218 = vmatprep.subr.bf16.mxu0 0
      %219 = vmatpush1.bf16.msra.mxu0 0
      %220 = vmatprep.subr.bf16.mxu0 0
      %221 = vmatpush1.bf16.msra.mxu0 0
      %222 = vmatprep.subr.bf16.mxu0 0
      %223 = vmatpush1.bf16.msra.mxu0 0
      %224 = vmatprep.subr.bf16.mxu0 0
      %225 = vmatpush1.bf16.msra.mxu0 0
      %226 = vmatprep.subr.bf16.mxu0 0
      %227 = vmatpush1.bf16.msra.mxu0 0
      %228 = vmatprep.mubr.bf16.mxu0 0
      %229 = vmatmul.mubr.bf16.gmra.mrb[0].mxu0 %v184
      %v230 = vpop.f32.mrb[0].mxu0
      %v231 = vadd.f32 0.0, %v230
      %v232 = vpop.f32.mrb[0].mxu0
      %v233 = vadd.f32 0.0, %v232
      %v234 = vpop.f32.mrb[0].mxu0
      %v235 = vadd.f32 0.0, %v234
      %v236 = vpop.f32.mrb[0].mxu0
      %v237 = vadd.f32 0.0, %v236
      %238 = vdwg.mxu0
      %239 = vmatprep.subr.bf16.mxu0 0
      %240 = vmatpush1.bf16.msra.mxu0 %v194
      %241 = vmatprep.subr.bf16.mxu0 0
      %242 = vmatpush1.bf16.msra.mxu0 0
      %243 = vmatprep.subr.bf16.mxu0 0
      %244 = vmatpush1.bf16.msra.mxu0 0
      %245 = vmatprep.subr.bf16.mxu0 0
      %246 = vmatpush1.bf16.msra.mxu0 0
      %247 = vmatprep.subr.bf16.mxu0 0
      %248 = vmatpush1.bf16.msra.mxu0 0
      %249 = vmatprep.subr.bf16.mxu0 0
      %250 = vmatpush1.bf16.msra.mxu0 0
      %251 = vmatprep.subr.bf16.mxu0 0
      %252 = vmatpush1.bf16.msra.mxu0 0
      %253 = vmatprep.subr.bf16.mxu0 0
      %254 = vmatpush1.bf16.msra.mxu0 0
      %255 = vmatprep.subr.bf16.mxu0 0
      %256 = vmatpush1.bf16.msra.mxu0 0
      %257 = vmatprep.subr.bf16.mxu0 0
      %258 = vmatpush1.bf16.msra.mxu0 0
      %259 = vmatprep.subr.bf16.mxu0 0
      %260 = vmatpush1.bf16.msra.mxu0 0
      %261 = vmatprep.subr.bf16.mxu0 0
      %262 = vmatpush1.bf16.msra.mxu0 0
      %263 = vmatprep.subr.bf16.mxu0 0
      %264 = vmatpush1.bf16.msra.mxu0 0
      %265 = vmatprep.subr.bf16.mxu0 0
      %266 = vmatpush1.bf16.msra.mxu0 0
      %267 = vmatprep.subr.bf16.mxu0 0
      %268 = vmatpush1.bf16.msra.mxu0 0
      %269 = vmatprep.subr.bf16.mxu0 0
      %270 = vmatpush1.bf16.msra.mxu0 0
      %271 = vmatprep.mubr.bf16.mxu0 0
      %272 = vmatmul.mubr.bf16.gmra.mrb[0].mxu0 %v184
      %v273 = vpop.f32.mrb[0].mxu0
      %v274 = vadd.f32 0.0, %v273
      %v275 = vpop.f32.mrb[0].mxu0
      %v276 = vpop.f32.mrb[0].mxu0
      %v277 = vadd.f32 0.0, %v276
      %v278 = vpop.f32.mrb[0].mxu0
      %279 = vdwg.mxu0
      %v282 = vunpack.c.l.b16 %v146
      %v283 = vunpack.c.l.b16 %v147
      %v284 = vpack.c.b16 %v283, %v282
      %v286 = vsel %vm182, %v284, 0
      %v289 = vsel %vm186, %v164, 0
      %v292 = vsel %vm186, %v172, 0
      %v295 = vsel %vm186, %v171, 0
      %297 = vmatprep.subr.bf16.mxu0 %v292
      %298 = vmatpush1.bf16.msra.mxu0 %v289
      %299 = vmatprep.subr.bf16.mxu0 0
      %300 = vmatpush1.bf16.msra.mxu0 0
      %301 = vmatprep.subr.bf16.mxu0 0
      %302 = vmatpush1.bf16.msra.mxu0 0
      %303 = vmatprep.subr.bf16.mxu0 0
      %304 = vmatpush1.bf16.msra.mxu0 0
      %305 = vmatprep.subr.bf16.mxu0 0
      %306 = vmatpush1.bf16.msra.mxu0 0
      %307 = vmatprep.subr.bf16.mxu0 0
      %308 = vmatpush1.bf16.msra.mxu0 0
      %309 = vmatprep.subr.bf16.mxu0 0
      %310 = vmatpush1.bf16.msra.mxu0 0
      %311 = vmatprep.subr.bf16.mxu0 0
      %312 = vmatpush1.bf16.msra.mxu0 0
      %313 = vmatprep.subr.bf16.mxu0 0
      %314 = vmatpush1.bf16.msra.mxu0 0
      %315 = vmatprep.subr.bf16.mxu0 0
      %316 = vmatpush1.bf16.msra.mxu0 0
      %317 = vmatprep.subr.bf16.mxu0 0
      %318 = vmatpush1.bf16.msra.mxu0 0
      %319 = vmatprep.subr.bf16.mxu0 0
      %320 = vmatpush1.bf16.msra.mxu0 0
      %321 = vmatprep.subr.bf16.mxu0 0
      %322 = vmatpush1.bf16.msra.mxu0 0
      %323 = vmatprep.subr.bf16.mxu0 0
      %324 = vmatpush1.bf16.msra.mxu0 0
      %325 = vmatprep.subr.bf16.mxu0 0
      %326 = vmatpush1.bf16.msra.mxu0 0
      %327 = vmatprep.subr.bf16.mxu0 0
      %328 = vmatpush1.bf16.msra.mxu0 0
      %329 = vmatprep.mubr.bf16.mxu0 0
      %330 = vmatmul.mubr.bf16.gmra.mrb[0].mxu0 %v286
      %v331 = vpop.f32.mrb[0].mxu0
      %v332 = vadd.f32 %v231, %v331
      %v333 = vpop.f32.mrb[0].mxu0
      %v334 = vadd.f32 %v233, %v333
      %v335 = vpop.f32.mrb[0].mxu0
      %v336 = vadd.f32 %v235, %v335
      %v337 = vpop.f32.mrb[0].mxu0
      %v338 = vadd.f32 %v237, %v337
      %339 = vdwg.mxu0
      %340 = vmatprep.subr.bf16.mxu0 0
      %341 = vmatpush1.bf16.msra.mxu0 %v295
      %342 = vmatprep.subr.bf16.mxu0 0
      %343 = vmatpush1.bf16.msra.mxu0 0
      %344 = vmatprep.subr.bf16.mxu0 0
      %345 = vmatpush1.bf16.msra.mxu0 0
      %346 = vmatprep.subr.bf16.mxu0 0
      %347 = vmatpush1.bf16.msra.mxu0 0
      %348 = vmatprep.subr.bf16.mxu0 0
      %349 = vmatpush1.bf16.msra.mxu0 0
      %350 = vmatprep.subr.bf16.mxu0 0
      %351 = vmatpush1.bf16.msra.mxu0 0
      %352 = vmatprep.subr.bf16.mxu0 0
      %353 = vmatpush1.bf16.msra.mxu0 0
      %354 = vmatprep.subr.bf16.mxu0 0
      %355 = vmatpush1.bf16.msra.mxu0 0
      %356 = vmatprep.subr.bf16.mxu0 0
      %357 = vmatpush1.bf16.msra.mxu0 0
      %358 = vmatprep.subr.bf16.mxu0 0
      %359 = vmatpush1.bf16.msra.mxu0 0
      %360 = vmatprep.subr.bf16.mxu0 0
      %361 = vmatpush1.bf16.msra.mxu0 0
      %362 = vmatprep.subr.bf16.mxu0 0
      %363 = vmatpush1.bf16.msra.mxu0 0
      %364 = vmatprep.subr.bf16.mxu0 0
      %365 = vmatpush1.bf16.msra.mxu0 0
      %366 = vmatprep.subr.bf16.mxu0 0
      %367 = vmatpush1.bf16.msra.mxu0 0
      %368 = vmatprep.subr.bf16.mxu0 0
      %369 = vmatpush1.bf16.msra.mxu0 0
      %370 = vmatprep.subr.bf16.mxu0 0
      %371 = vmatpush1.bf16.msra.mxu0 0
      %372 = vmatprep.mubr.bf16.mxu0 0
      %373 = vmatmul.mubr.bf16.gmra.mrb[0].mxu0 %v286
      %v374 = vpop.f32.mrb[0].mxu0
      %v375 = vadd.f32 %v274, %v374
      %v376 = vpop.f32.mrb[0].mxu0
      %v377 = vpop.f32.mrb[0].mxu0
      %v378 = vadd.f32 %v277, %v377
      %v379 = vpop.f32.mrb[0].mxu0
      %380 = vdwg.mxu0
      %v381 = vld [vmem:[%s138] sm:$0x3f]
      %s382 = scalar_lea.vmem %s1, 16
      %v383 = vld [vmem:[%s382] sm:$0xf]
      %v384 = vld [vmem:[%s382 + $0x4] sm:$0xf]
      %v387 = vunpack.c.l.b16 %v383
      %v388 = vunpack.c.l.b16 %v384
      %v389 = vpack.c.b16 %v388, %v387
      %v391 = vcombine.high %v381, %v381
      %v393 = vunpack.c.l.s4 1983009808
      %v394 = vunpack.c.0.s8 %v393
      %v395 = vlaneseq
      %v396 = vshrl.u32 %v395, 7
      %v397 = vsub.s32 %v394, %v396
      %v398 = vrot.slane %v381, %v397
      %v400 = vunpack.c.l.s4 1983009808
      %v401 = vunpack.c.0.s8 %v400
      %v402 = vlaneseq
      %v403 = vshrl.u32 %v402, 7
      %v404 = vsub.s32 %v401, %v403
      %v405 = vrot.slane %v391, %v404
      %v406 = vcombine.high %v398, %v398
      %407 = vrot.lane.b32.xlu0 %v398, 126
      %v408 = vpop.permute.xlu0 %407
      %409 = vrot.lane.b32.xlu0 %v406, 126
      %v410 = vpop.permute.xlu0 %409
      %411 = vrot.lane.b32.xlu0 %v405, 126
      %v412 = vpop.permute.xlu0 %411
      %vm413 = vcmask 1031168
      %v414 = vsel %vm413, %v408, %v410
      %v415 = vsel %vm413, %v410, %v412
      %v417 = vsel %vm182, %v389, 0
      %v420 = vsel %vm186, %v414, 0
      %v423 = vsel %vm186, %v415, 0
      %v426 = vsel %vm186, %v412, 0
      %428 = vmatprep.subr.bf16.mxu0 %v423
      %429 = vmatpush1.bf16.msra.mxu0 %v420
      %430 = vmatprep.subr.bf16.mxu0 0
      %431 = vmatpush1.bf16.msra.mxu0 0
      %432 = vmatprep.subr.bf16.mxu0 0
      %433 = vmatpush1.bf16.msra.mxu0 0
      %434 = vmatprep.subr.bf16.mxu0 0
      %435 = vmatpush1.bf16.msra.mxu0 0
      %436 = vmatprep.subr.bf16.mxu0 0
      %437 = vmatpush1.bf16.msra.mxu0 0
      %438 = vmatprep.subr.bf16.mxu0 0
      %439 = vmatpush1.bf16.msra.mxu0 0
      %440 = vmatprep.subr.bf16.mxu0 0
      %441 = vmatpush1.bf16.msra.mxu0 0
      %442 = vmatprep.subr.bf16.mxu0 0
      %443 = vmatpush1.bf16.msra.mxu0 0
      %444 = vmatprep.subr.bf16.mxu0 0
      %445 = vmatpush1.bf16.msra.mxu0 0
      %446 = vmatprep.subr.bf16.mxu0 0
      %447 = vmatpush1.bf16.msra.mxu0 0
      %448 = vmatprep.subr.bf16.mxu0 0
      %449 = vmatpush1.bf16.msra.mxu0 0
      %450 = vmatprep.subr.bf16.mxu0 0
      %451 = vmatpush1.bf16.msra.mxu0 0
      %452 = vmatprep.subr.bf16.mxu0 0
      %453 = vmatpush1.bf16.msra.mxu0 0
      %454 = vmatprep.subr.bf16.mxu0 0
      %455 = vmatpush1.bf16.msra.mxu0 0
      %456 = vmatprep.subr.bf16.mxu0 0
      %457 = vmatpush1.bf16.msra.mxu0 0
      %458 = vmatprep.subr.bf16.mxu0 0
      %459 = vmatpush1.bf16.msra.mxu0 0
      %460 = vmatprep.mubr.bf16.mxu0 0
      %461 = vmatmul.mubr.bf16.gmra.mrb[0].mxu0 %v417
      %v462 = vpop.f32.mrb[0].mxu0
      %v463 = vadd.f32 0.0, %v462
      %v464 = vpop.f32.mrb[0].mxu0
      %v465 = vadd.f32 0.0, %v464
      %v466 = vpop.f32.mrb[0].mxu0
      %v467 = vadd.f32 0.0, %v466
      %v468 = vpop.f32.mrb[0].mxu0
      %v469 = vadd.f32 0.0, %v468
      %470 = vdwg.mxu0
      %471 = vmatprep.subr.bf16.mxu0 0
      %472 = vmatpush1.bf16.msra.mxu0 %v426
      %473 = vmatprep.subr.bf16.mxu0 0
      %474 = vmatpush1.bf16.msra.mxu0 0
      %475 = vmatprep.subr.bf16.mxu0 0
      %476 = vmatpush1.bf16.msra.mxu0 0
      %477 = vmatprep.subr.bf16.mxu0 0
      %478 = vmatpush1.bf16.msra.mxu0 0
      %479 = vmatprep.subr.bf16.mxu0 0
      %480 = vmatpush1.bf16.msra.mxu0 0
      %481 = vmatprep.subr.bf16.mxu0 0
      %482 = vmatpush1.bf16.msra.mxu0 0
      %483 = vmatprep.subr.bf16.mxu0 0
      %484 = vmatpush1.bf16.msra.mxu0 0
      %485 = vmatprep.subr.bf16.mxu0 0
      %486 = vmatpush1.bf16.msra.mxu0 0
      %487 = vmatprep.subr.bf16.mxu0 0
      %488 = vmatpush1.bf16.msra.mxu0 0
      %489 = vmatprep.subr.bf16.mxu0 0
      %490 = vmatpush1.bf16.msra.mxu0 0
      %491 = vmatprep.subr.bf16.mxu0 0
      %492 = vmatpush1.bf16.msra.mxu0 0
      %493 = vmatprep.subr.bf16.mxu0 0
      %494 = vmatpush1.bf16.msra.mxu0 0
      %495 = vmatprep.subr.bf16.mxu0 0
      %496 = vmatpush1.bf16.msra.mxu0 0
      %497 = vmatprep.subr.bf16.mxu0 0
      %498 = vmatpush1.bf16.msra.mxu0 0
      %499 = vmatprep.subr.bf16.mxu0 0
      %500 = vmatpush1.bf16.msra.mxu0 0
      %501 = vmatprep.subr.bf16.mxu0 0
      %502 = vmatpush1.bf16.msra.mxu0 0
      %503 = vmatprep.mubr.bf16.mxu0 0
      %504 = vmatmul.mubr.bf16.gmra.mrb[0].mxu0 %v417
      %v505 = vpop.f32.mrb[0].mxu0
      %v506 = vadd.f32 0.0, %v505
      %v507 = vpop.f32.mrb[0].mxu0
      %v508 = vpop.f32.mrb[0].mxu0
      %v509 = vadd.f32 0.0, %v508
      %v510 = vpop.f32.mrb[0].mxu0
      %511 = vdwg.mxu0
      %v512 = vadd.f32 %v332, %v463
      %v513 = vadd.f32 %v334, %v465
      %v514 = vadd.f32 %v375, %v506
      %v515 = vadd.f32 %v336, %v467
      %v516 = vadd.f32 %v338, %v469
      %v517 = vadd.f32 %v378, %v509
      %v518 = vld [vmem:[%s138] sm:$0x3f]
      %s519 = scalar_lea.vmem %s1, 24
      %v520 = vld [vmem:[%s519] sm:$0xf]
      %v521 = vld [vmem:[%s519 + $0x4] sm:$0xf]
      %v524 = vunpack.c.l.b16 %v520
      %v525 = vunpack.c.l.b16 %v521
      %v526 = vpack.c.b16 %v525, %v524
      %v528 = vcombine.high %v518, %v518
      %v530 = vunpack.c.l.s4 1983009808
      %v531 = vunpack.c.0.s8 %v530
      %v532 = vlaneseq
      %v533 = vshrl.u32 %v532, 7
      %v534 = vsub.s32 %v531, %v533
      %v535 = vrot.slane %v518, %v534
      %v537 = vunpack.c.l.s4 1983009808
      %v538 = vunpack.c.0.s8 %v537
      %v539 = vlaneseq
      %v540 = vshrl.u32 %v539, 7
      %v541 = vsub.s32 %v538, %v540
      %v542 = vrot.slane %v528, %v541
      %v543 = vcombine.high %v535, %v535
      %544 = vrot.lane.b32.xlu0 %v535, 110
      %v545 = vpop.permute.xlu0 %544
      %546 = vrot.lane.b32.xlu0 %v543, 110
      %v547 = vpop.permute.xlu0 %546
      %548 = vrot.lane.b32.xlu0 %v542, 110
      %v549 = vpop.permute.xlu0 %548
      %vm550 = vcmask 900096
      %v551 = vsel %vm550, %v545, %v547
      %v552 = vsel %vm550, %v547, %v549
      %v554 = vsel %vm182, %v526, 0
      %v557 = vsel %vm186, %v551, 0
      %v560 = vsel %vm186, %v552, 0
      %v563 = vsel %vm186, %v549, 0
      %565 = vmatprep.subr.bf16.mxu0 %v560
      %566 = vmatpush1.bf16.msra.mxu0 %v557
      %567 = vmatprep.subr.bf16.mxu0 0
      %568 = vmatpush1.bf16.msra.mxu0 0
      %569 = vmatprep.subr.bf16.mxu0 0
      %570 = vmatpush1.bf16.msra.mxu0 0
      %571 = vmatprep.subr.bf16.mxu0 0
      %572 = vmatpush1.bf16.msra.mxu0 0
      %573 = vmatprep.subr.bf16.mxu0 0
      %574 = vmatpush1.bf16.msra.mxu0 0
      %575 = vmatprep.subr.bf16.mxu0 0
      %576 = vmatpush1.bf16.msra.mxu0 0
      %577 = vmatprep.subr.bf16.mxu0 0
      %578 = vmatpush1.bf16.msra.mxu0 0
      %579 = vmatprep.subr.bf16.mxu0 0
      %580 = vmatpush1.bf16.msra.mxu0 0
      %581 = vmatprep.subr.bf16.mxu0 0
      %582 = vmatpush1.bf16.msra.mxu0 0
      %583 = vmatprep.subr.bf16.mxu0 0
      %584 = vmatpush1.bf16.msra.mxu0 0
      %585 = vmatprep.subr.bf16.mxu0 0
      %586 = vmatpush1.bf16.msra.mxu0 0
      %587 = vmatprep.subr.bf16.mxu0 0
      %588 = vmatpush1.bf16.msra.mxu0 0
      %589 = vmatprep.subr.bf16.mxu0 0
      %590 = vmatpush1.bf16.msra.mxu0 0
      %591 = vmatprep.subr.bf16.mxu0 0
      %592 = vmatpush1.bf16.msra.mxu0 0
      %593 = vmatprep.subr.bf16.mxu0 0
      %594 = vmatpush1.bf16.msra.mxu0 0
      %595 = vmatprep.subr.bf16.mxu0 0
      %596 = vmatpush1.bf16.msra.mxu0 0
      %597 = vmatprep.mubr.bf16.mxu0 0
      %598 = vmatmul.mubr.bf16.gmra.mrb[0].mxu0 %v554
      %v599 = vpop.f32.mrb[0].mxu0
      %v600 = vadd.f32 0.0, %v599
      %v601 = vpop.f32.mrb[0].mxu0
      %v602 = vadd.f32 0.0, %v601
      %v603 = vpop.f32.mrb[0].mxu0
      %v604 = vadd.f32 0.0, %v603
      %v605 = vpop.f32.mrb[0].mxu0
      %v606 = vadd.f32 0.0, %v605
      %607 = vdwg.mxu0
      %608 = vmatprep.subr.bf16.mxu0 0
      %609 = vmatpush1.bf16.msra.mxu0 %v563
      %610 = vmatprep.subr.bf16.mxu0 0
      %611 = vmatpush1.bf16.msra.mxu0 0
      %612 = vmatprep.subr.bf16.mxu0 0
      %613 = vmatpush1.bf16.msra.mxu0 0
      %614 = vmatprep.subr.bf16.mxu0 0
      %615 = vmatpush1.bf16.msra.mxu0 0
      %616 = vmatprep.subr.bf16.mxu0 0
      %617 = vmatpush1.bf16.msra.mxu0 0
      %618 = vmatprep.subr.bf16.mxu0 0
      %619 = vmatpush1.bf16.msra.mxu0 0
      %620 = vmatprep.subr.bf16.mxu0 0
      %621 = vmatpush1.bf16.msra.mxu0 0
      %622 = vmatprep.subr.bf16.mxu0 0
      %623 = vmatpush1.bf16.msra.mxu0 0
      %624 = vmatprep.subr.bf16.mxu0 0
      %625 = vmatpush1.bf16.msra.mxu0 0
      %626 = vmatprep.subr.bf16.mxu0 0
      %627 = vmatpush1.bf16.msra.mxu0 0
      %628 = vmatprep.subr.bf16.mxu0 0
      %629 = vmatpush1.bf16.msra.mxu0 0
      %630 = vmatprep.subr.bf16.mxu0 0
      %631 = vmatpush1.bf16.msra.mxu0 0
      %632 = vmatprep.subr.bf16.mxu0 0
      %633 = vmatpush1.bf16.msra.mxu0 0
      %634 = vmatprep.subr.bf16.mxu0 0
      %635 = vmatpush1.bf16.msra.mxu0 0
      %636 = vmatprep.subr.bf16.mxu0 0
      %637 = vmatpush1.bf16.msra.mxu0 0
      %638 = vmatprep.subr.bf16.mxu0 0
      %639 = vmatpush1.bf16.msra.mxu0 0
      %640 = vmatprep.mubr.bf16.mxu0 0
      %641 = vmatmul.mubr.bf16.gmra.mrb[0].mxu0 %v554
      %v642 = vpop.f32.mrb[0].mxu0
      %v643 = vadd.f32 0.0, %v642
      %v644 = vpop.f32.mrb[0].mxu0
      %v645 = vpop.f32.mrb[0].mxu0
      %v646 = vadd.f32 0.0, %v645
      %v647 = vpop.f32.mrb[0].mxu0
      %648 = vdwg.mxu0
      %v649 = vadd.f32 %v512, %v600
      %v650 = vadd.f32 %v513, %v602
      %v651 = vadd.f32 %v514, %v643
      %v652 = vadd.f32 %v515, %v604
      %v653 = vadd.f32 %v516, %v606
      %v654 = vadd.f32 %v517, %v646
      %v655 = vld [vmem:[%s138] sm:$0x3f]
      %s656 = scalar_lea.vmem %s1, 32
      %v657 = vld [vmem:[%s656] sm:$0xf]
      %v658 = vld [vmem:[%s656 + $0x4] sm:$0xf]
      %v661 = vunpack.c.l.b16 %v657
      %v662 = vunpack.c.l.b16 %v658
      %v663 = vpack.c.b16 %v662, %v661
      %v665 = vcombine.high %v655, %v655
      %v667 = vunpack.c.l.s4 1983009808
      %v668 = vunpack.c.0.s8 %v667
      %v669 = vlaneseq
      %v670 = vshrl.u32 %v669, 7
      %v671 = vsub.s32 %v668, %v670
      %v672 = vrot.slane %v655, %v671
      %v674 = vunpack.c.l.s4 1983009808
      %v675 = vunpack.c.0.s8 %v674
      %v676 = vlaneseq
      %v677 = vshrl.u32 %v676, 7
      %v678 = vsub.s32 %v675, %v677
      %v679 = vrot.slane %v665, %v678
      %v680 = vcombine.high %v672, %v672
      %681 = vrot.lane.b32.xlu0 %v672, 109
      %v682 = vpop.permute.xlu0 %681
      %683 = vrot.lane.b32.xlu0 %v680, 109
      %v684 = vpop.permute.xlu0 %683
      %685 = vrot.lane.b32.xlu0 %v679, 109
      %v686 = vpop.permute.xlu0 %685
      %vm687 = vcmask 891904
      %v688 = vsel %vm687, %v682, %v684
      %v689 = vsel %vm687, %v684, %v686
      %v691 = vsel %vm182, %v663, 0
      %v694 = vsel %vm186, %v688, 0
      %v697 = vsel %vm186, %v689, 0
      %v700 = vsel %vm186, %v686, 0
      %702 = vmatprep.subr.bf16.mxu0 %v697
      %703 = vmatpush1.bf16.msra.mxu0 %v694
      %704 = vmatprep.subr.bf16.mxu0 0
      %705 = vmatpush1.bf16.msra.mxu0 0
      %706 = vmatprep.subr.bf16.mxu0 0
      %707 = vmatpush1.bf16.msra.mxu0 0
      %708 = vmatprep.subr.bf16.mxu0 0
      %709 = vmatpush1.bf16.msra.mxu0 0
      %710 = vmatprep.subr.bf16.mxu0 0
      %711 = vmatpush1.bf16.msra.mxu0 0
      %712 = vmatprep.subr.bf16.mxu0 0
      %713 = vmatpush1.bf16.msra.mxu0 0
      %714 = vmatprep.subr.bf16.mxu0 0
      %715 = vmatpush1.bf16.msra.mxu0 0
      %716 = vmatprep.subr.bf16.mxu0 0
      %717 = vmatpush1.bf16.msra.mxu0 0
      %718 = vmatprep.subr.bf16.mxu0 0
      %719 = vmatpush1.bf16.msra.mxu0 0
      %720 = vmatprep.subr.bf16.mxu0 0
      %721 = vmatpush1.bf16.msra.mxu0 0
      %722 = vmatprep.subr.bf16.mxu0 0
      %723 = vmatpush1.bf16.msra.mxu0 0
      %724 = vmatprep.subr.bf16.mxu0 0
      %725 = vmatpush1.bf16.msra.mxu0 0
      %726 = vmatprep.subr.bf16.mxu0 0
      %727 = vmatpush1.bf16.msra.mxu0 0
      %728 = vmatprep.subr.bf16.mxu0 0
      %729 = vmatpush1.bf16.msra.mxu0 0
      %730 = vmatprep.subr.bf16.mxu0 0
      %731 = vmatpush1.bf16.msra.mxu0 0
      %732 = vmatprep.subr.bf16.mxu0 0
      %733 = vmatpush1.bf16.msra.mxu0 0
      %734 = vmatprep.mubr.bf16.mxu0 0
      %735 = vmatmul.mubr.bf16.gmra.mrb[0].mxu0 %v691
      %v736 = vpop.f32.mrb[0].mxu0
      %v737 = vadd.f32 0.0, %v736
      %v738 = vpop.f32.mrb[0].mxu0
      %v739 = vadd.f32 0.0, %v738
      %v740 = vpop.f32.mrb[0].mxu0
      %v741 = vadd.f32 0.0, %v740
      %v742 = vpop.f32.mrb[0].mxu0
      %v743 = vadd.f32 0.0, %v742
      %744 = vdwg.mxu0
      %745 = vmatprep.subr.bf16.mxu0 0
      %746 = vmatpush1.bf16.msra.mxu0 %v700
      %747 = vmatprep.subr.bf16.mxu0 0
      %748 = vmatpush1.bf16.msra.mxu0 0
      %749 = vmatprep.subr.bf16.mxu0 0
      %750 = vmatpush1.bf16.msra.mxu0 0
      %751 = vmatprep.subr.bf16.mxu0 0
      %752 = vmatpush1.bf16.msra.mxu0 0
      %753 = vmatprep.subr.bf16.mxu0 0
      %754 = vmatpush1.bf16.msra.mxu0 0
      %755 = vmatprep.subr.bf16.mxu0 0
      %756 = vmatpush1.bf16.msra.mxu0 0
      %757 = vmatprep.subr.bf16.mxu0 0
      %758 = vmatpush1.bf16.msra.mxu0 0
      %759 = vmatprep.subr.bf16.mxu0 0
      %760 = vmatpush1.bf16.msra.mxu0 0
      %761 = vmatprep.subr.bf16.mxu0 0
      %762 = vmatpush1.bf16.msra.mxu0 0
      %763 = vmatprep.subr.bf16.mxu0 0
      %764 = vmatpush1.bf16.msra.mxu0 0
      %765 = vmatprep.subr.bf16.mxu0 0
      %766 = vmatpush1.bf16.msra.mxu0 0
      %767 = vmatprep.subr.bf16.mxu0 0
      %768 = vmatpush1.bf16.msra.mxu0 0
      %769 = vmatprep.subr.bf16.mxu0 0
      %770 = vmatpush1.bf16.msra.mxu0 0
      %771 = vmatprep.subr.bf16.mxu0 0
      %772 = vmatpush1.bf16.msra.mxu0 0
      %773 = vmatprep.subr.bf16.mxu0 0
      %774 = vmatpush1.bf16.msra.mxu0 0
      %775 = vmatprep.subr.bf16.mxu0 0
      %776 = vmatpush1.bf16.msra.mxu0 0
      %777 = vmatprep.mubr.bf16.mxu0 0
      %778 = vmatmul.mubr.bf16.gmra.mrb[0].mxu0 %v691
      %v779 = vpop.f32.mrb[0].mxu0
      %v780 = vadd.f32 0.0, %v779
      %v781 = vpop.f32.mrb[0].mxu0
      %v782 = vpop.f32.mrb[0].mxu0
      %v783 = vadd.f32 0.0, %v782
      %v784 = vpop.f32.mrb[0].mxu0
      %785 = vdwg.mxu0
      %v786 = vadd.f32 %v649, %v737
      %v787 = vadd.f32 %v650, %v739
      %v788 = vadd.f32 %v651, %v780
      %v789 = vadd.f32 %v652, %v741
      %v790 = vadd.f32 %v653, %v743
      %v791 = vadd.f32 %v654, %v783
      %v792 = vld [vmem:[%s138] sm:$0x3f]
      %s793 = scalar_lea.vmem %s1, 40
      %v794 = vld [vmem:[%s793] sm:$0xf]
      %v795 = vld [vmem:[%s793 + $0x4] sm:$0xf]
      %v798 = vunpack.c.l.b16 %v794
      %v799 = vunpack.c.l.b16 %v795
      %v800 = vpack.c.b16 %v799, %v798
      %v802 = vcombine.high %v792, %v792
      %v804 = vunpack.c.l.s4 1983009808
      %v805 = vunpack.c.0.s8 %v804
      %v806 = vlaneseq
      %v807 = vshrl.u32 %v806, 7
      %v808 = vsub.s32 %v805, %v807
      %v809 = vrot.slane %v792, %v808
      %v811 = vunpack.c.l.s4 1983009808
      %v812 = vunpack.c.0.s8 %v811
      %v813 = vlaneseq
      %v814 = vshrl.u32 %v813, 7
      %v815 = vsub.s32 %v812, %v814
      %v816 = vrot.slane %v802, %v815
      %v817 = vcombine.high %v809, %v809
      %818 = vrot.lane.b32.xlu0 %v809, 108
      %v819 = vpop.permute.xlu0 %818
      %820 = vrot.lane.b32.xlu0 %v817, 108
      %v821 = vpop.permute.xlu0 %820
      %822 = vrot.lane.b32.xlu0 %v816, 108
      %v823 = vpop.permute.xlu0 %822
      %vm824 = vcmask 883712
      %v825 = vsel %vm824, %v819, %v821
      %v826 = vsel %vm824, %v821, %v823
      %v828 = vsel %vm182, %v800, 0
      %v831 = vsel %vm186, %v825, 0
      %v834 = vsel %vm186, %v826, 0
      %v837 = vsel %vm186, %v823, 0
      %839 = vmatprep.subr.bf16.mxu0 %v834
      %840 = vmatpush1.bf16.msra.mxu0 %v831
      %841 = vmatprep.subr.bf16.mxu0 0
      %842 = vmatpush1.bf16.msra.mxu0 0
      %843 = vmatprep.subr.bf16.mxu0 0
      %844 = vmatpush1.bf16.msra.mxu0 0
      %845 = vmatprep.subr.bf16.mxu0 0
      %846 = vmatpush1.bf16.msra.mxu0 0
      %847 = vmatprep.subr.bf16.mxu0 0
      %848 = vmatpush1.bf16.msra.mxu0 0
      %849 = vmatprep.subr.bf16.mxu0 0
      %850 = vmatpush1.bf16.msra.mxu0 0
      %851 = vmatprep.subr.bf16.mxu0 0
      %852 = vmatpush1.bf16.msra.mxu0 0
      %853 = vmatprep.subr.bf16.mxu0 0
      %854 = vmatpush1.bf16.msra.mxu0 0
      %855 = vmatprep.subr.bf16.mxu0 0
      %856 = vmatpush1.bf16.msra.mxu0 0
      %857 = vmatprep.subr.bf16.mxu0 0
      %858 = vmatpush1.bf16.msra.mxu0 0
      %859 = vmatprep.subr.bf16.mxu0 0
      %860 = vmatpush1.bf16.msra.mxu0 0
      %861 = vmatprep.subr.bf16.mxu0 0
      %862 = vmatpush1.bf16.msra.mxu0 0
      %863 = vmatprep.subr.bf16.mxu0 0
      %864 = vmatpush1.bf16.msra.mxu0 0
      %865 = vmatprep.subr.bf16.mxu0 0
      %866 = vmatpush1.bf16.msra.mxu0 0
      %867 = vmatprep.subr.bf16.mxu0 0
      %868 = vmatpush1.bf16.msra.mxu0 0
      %869 = vmatprep.subr.bf16.mxu0 0
      %870 = vmatpush1.bf16.msra.mxu0 0
      %871 = vmatprep.mubr.bf16.mxu0 0
      %872 = vmatmul.mubr.bf16.gmra.mrb[0].mxu0 %v828
      %v873 = vpop.f32.mrb[0].mxu0
      %v874 = vadd.f32 0.0, %v873
      %v875 = vpop.f32.mrb[0].mxu0
      %v876 = vadd.f32 0.0, %v875
      %v877 = vpop.f32.mrb[0].mxu0
      %v878 = vadd.f32 0.0, %v877
      %v879 = vpop.f32.mrb[0].mxu0
      %v880 = vadd.f32 0.0, %v879
      %881 = vdwg.mxu0
      %882 = vmatprep.subr.bf16.mxu0 0
      %883 = vmatpush1.bf16.msra.mxu0 %v837
      %884 = vmatprep.subr.bf16.mxu0 0
      %885 = vmatpush1.bf16.msra.mxu0 0
      %886 = vmatprep.subr.bf16.mxu0 0
      %887 = vmatpush1.bf16.msra.mxu0 0
      %888 = vmatprep.subr.bf16.mxu0 0
      %889 = vmatpush1.bf16.msra.mxu0 0
      %890 = vmatprep.subr.bf16.mxu0 0
      %891 = vmatpush1.bf16.msra.mxu0 0
      %892 = vmatprep.subr.bf16.mxu0 0
      %893 = vmatpush1.bf16.msra.mxu0 0
      %894 = vmatprep.subr.bf16.mxu0 0
      %895 = vmatpush1.bf16.msra.mxu0 0
      %896 = vmatprep.subr.bf16.mxu0 0
      %897 = vmatpush1.bf16.msra.mxu0 0
      %898 = vmatprep.subr.bf16.mxu0 0
      %899 = vmatpush1.bf16.msra.mxu0 0
      %900 = vmatprep.subr.bf16.mxu0 0
      %901 = vmatpush1.bf16.msra.mxu0 0
      %902 = vmatprep.subr.bf16.mxu0 0
      %903 = vmatpush1.bf16.msra.mxu0 0
      %904 = vmatprep.subr.bf16.mxu0 0
      %905 = vmatpush1.bf16.msra.mxu0 0
      %906 = vmatprep.subr.bf16.mxu0 0
      %907 = vmatpush1.bf16.msra.mxu0 0
      %908 = vmatprep.subr.bf16.mxu0 0
      %909 = vmatpush1.bf16.msra.mxu0 0
      %910 = vmatprep.subr.bf16.mxu0 0
      %911 = vmatpush1.bf16.msra.mxu0 0
      %912 = vmatprep.subr.bf16.mxu0 0
      %913 = vmatpush1.bf16.msra.mxu0 0
      %914 = vmatprep.mubr.bf16.mxu0 0
      %915 = vmatmul.mubr.bf16.gmra.mrb[0].mxu0 %v828
      %v916 = vpop.f32.mrb[0].mxu0
      %v917 = vadd.f32 0.0, %v916
      %v918 = vpop.f32.mrb[0].mxu0
      %v919 = vpop.f32.mrb[0].mxu0
      %v920 = vadd.f32 0.0, %v919
      %v921 = vpop.f32.mrb[0].mxu0
      %922 = vdwg.mxu0
      %v923 = vadd.f32 %v786, %v874
      %v924 = vadd.f32 %v787, %v876
      %v925 = vadd.f32 %v788, %v917
      %v926 = vadd.f32 %v789, %v878
      %v927 = vadd.f32 %v790, %v880
      %v928 = vadd.f32 %v791, %v920
      %v929 = vld [vmem:[%s138] sm:$0x3f]
      %s930 = scalar_lea.vmem %s1, 48
      %v931 = vld [vmem:[%s930] sm:$0xf]
      %v932 = vld [vmem:[%s930 + $0x4] sm:$0xf]
      %v935 = vunpack.c.l.b16 %v931
      %v936 = vunpack.c.l.b16 %v932
      %v937 = vpack.c.b16 %v936, %v935
      %v939 = vcombine.high %v929, %v929
      %v941 = vunpack.c.l.s4 1983009808
      %v942 = vunpack.c.0.s8 %v941
      %v943 = vlaneseq
      %v944 = vshrl.u32 %v943, 7
      %v945 = vsub.s32 %v942, %v944
      %v946 = vrot.slane %v929, %v945
      %v948 = vunpack.c.l.s4 1983009808
      %v949 = vunpack.c.0.s8 %v948
      %v950 = vlaneseq
      %v951 = vshrl.u32 %v950, 7
      %v952 = vsub.s32 %v949, %v951
      %v953 = vrot.slane %v939, %v952
      %v954 = vcombine.high %v946, %v946
      %955 = vrot.lane.b32.xlu0 %v946, 92
      %v956 = vpop.permute.xlu0 %955
      %957 = vrot.lane.b32.xlu0 %v954, 92
      %v958 = vpop.permute.xlu0 %957
      %959 = vrot.lane.b32.xlu0 %v953, 92
      %v960 = vpop.permute.xlu0 %959
      %vm961 = vcmask 752640
      %v962 = vsel %vm961, %v956, %v958
      %v963 = vsel %vm961, %v958, %v960
      %v965 = vsel %vm182, %v937, 0
      %v968 = vsel %vm186, %v962, 0
      %v971 = vsel %vm186, %v963, 0
      %v974 = vsel %vm186, %v960, 0
      %976 = vmatprep.subr.bf16.mxu0 %v971
      %977 = vmatpush1.bf16.msra.mxu0 %v968
      %978 = vmatprep.subr.bf16.mxu0 0
      %979 = vmatpush1.bf16.msra.mxu0 0
      %980 = vmatprep.subr.bf16.mxu0 0
      %981 = vmatpush1.bf16.msra.mxu0 0
      %982 = vmatprep.subr.bf16.mxu0 0
      %983 = vmatpush1.bf16.msra.mxu0 0
      %984 = vmatprep.subr.bf16.mxu0 0
      %985 = vmatpush1.bf16.msra.mxu0 0
      %986 = vmatprep.subr.bf16.mxu0 0
      %987 = vmatpush1.bf16.msra.mxu0 0
      %988 = vmatprep.subr.bf16.mxu0 0
      %989 = vmatpush1.bf16.msra.mxu0 0
      %990 = vmatprep.subr.bf16.mxu0 0
      %991 = vmatpush1.bf16.msra.mxu0 0
      %992 = vmatprep.subr.bf16.mxu0 0
      %993 = vmatpush1.bf16.msra.mxu0 0
      %994 = vmatprep.subr.bf16.mxu0 0
      %995 = vmatpush1.bf16.msra.mxu0 0
      %996 = vmatprep.subr.bf16.mxu0 0
      %997 = vmatpush1.bf16.msra.mxu0 0
      %998 = vmatprep.subr.bf16.mxu0 0
      %999 = vmatpush1.bf16.msra.mxu0 0
      %1000 = vmatprep.subr.bf16.mxu0 0
      %1001 = vmatpush1.bf16.msra.mxu0 0
      %1002 = vmatprep.subr.bf16.mxu0 0
      %1003 = vmatpush1.bf16.msra.mxu0 0
      %1004 = vmatprep.subr.bf16.mxu0 0
      %1005 = vmatpush1.bf16.msra.mxu0 0
      %1006 = vmatprep.subr.bf16.mxu0 0
      %1007 = vmatpush1.bf16.msra.mxu0 0
      %1008 = vmatprep.mubr.bf16.mxu0 0
      %1009 = vmatmul.mubr.bf16.gmra.mrb[0].mxu0 %v965
      %v1010 = vpop.f32.mrb[0].mxu0
      %v1011 = vadd.f32 0.0, %v1010
      %v1012 = vpop.f32.mrb[0].mxu0
      %v1013 = vadd.f32 0.0, %v1012
      %v1014 = vpop.f32.mrb[0].mxu0
      %v1015 = vadd.f32 0.0, %v1014
      %v1016 = vpop.f32.mrb[0].mxu0
      %v1017 = vadd.f32 0.0, %v1016
      %1018 = vdwg.mxu0
      %1019 = vmatprep.subr.bf16.mxu0 0
      %1020 = vmatpush1.bf16.msra.mxu0 %v974
      %1021 = vmatprep.subr.bf16.mxu0 0
      %1022 = vmatpush1.bf16.msra.mxu0 0
      %1023 = vmatprep.subr.bf16.mxu0 0
      %1024 = vmatpush1.bf16.msra.mxu0 0
      %1025 = vmatprep.subr.bf16.mxu0 0
      %1026 = vmatpush1.bf16.msra.mxu0 0
      %1027 = vmatprep.subr.bf16.mxu0 0
      %1028 = vmatpush1.bf16.msra.mxu0 0
      %1029 = vmatprep.subr.bf16.mxu0 0
      %1030 = vmatpush1.bf16.msra.mxu0 0
      %1031 = vmatprep.subr.bf16.mxu0 0
      %1032 = vmatpush1.bf16.msra.mxu0 0
      %1033 = vmatprep.subr.bf16.mxu0 0
      %1034 = vmatpush1.bf16.msra.mxu0 0
      %1035 = vmatprep.subr.bf16.mxu0 0
      %1036 = vmatpush1.bf16.msra.mxu0 0
      %1037 = vmatprep.subr.bf16.mxu0 0
      %1038 = vmatpush1.bf16.msra.mxu0 0
      %1039 = vmatprep.subr.bf16.mxu0 0
      %1040 = vmatpush1.bf16.msra.mxu0 0
      %1041 = vmatprep.subr.bf16.mxu0 0
      %1042 = vmatpush1.bf16.msra.mxu0 0
      %1043 = vmatprep.subr.bf16.mxu0 0
      %1044 = vmatpush1.bf16.msra.mxu0 0
      %1045 = vmatprep.subr.bf16.mxu0 0
      %1046 = vmatpush1.bf16.msra.mxu0 0
      %1047 = vmatprep.subr.bf16.mxu0 0
      %1048 = vmatpush1.bf16.msra.mxu0 0
      %1049 = vmatprep.subr.bf16.mxu0 0
      %1050 = vmatpush1.bf16.msra.mxu0 0
      %1051 = vmatprep.mubr.bf16.mxu0 0
      %1052 = vmatmul.mubr.bf16.gmra.mrb[0].mxu0 %v965
      %v1053 = vpop.f32.mrb[0].mxu0
      %v1054 = vadd.f32 0.0, %v1053
      %v1055 = vpop.f32.mrb[0].mxu0
      %v1056 = vpop.f32.mrb[0].mxu0
      %v1057 = vadd.f32 0.0, %v1056
      %v1058 = vpop.f32.mrb[0].mxu0
      %1059 = vdwg.mxu0
      %v1060 = vadd.f32 %v923, %v1011
      %v1061 = vadd.f32 %v924, %v1013
      %v1062 = vadd.f32 %v925, %v1054
      %v1063 = vadd.f32 %v926, %v1015
      %v1064 = vadd.f32 %v927, %v1017
      %v1065 = vadd.f32 %v928, %v1057
      %v1066 = vld [vmem:[%s138] sm:$0x3f]
      %s1067 = scalar_lea.vmem %s1, 56
      %v1068 = vld [vmem:[%s1067] sm:$0xf]
      %v1069 = vld [vmem:[%s1067 + $0x4] sm:$0xf]
      %v1072 = vunpack.c.l.b16 %v1068
      %v1073 = vunpack.c.l.b16 %v1069
      %v1074 = vpack.c.b16 %v1073, %v1072
      %v1076 = vcombine.high %v1066, %v1066
      %v1078 = vunpack.c.l.s4 1983009808
      %v1079 = vunpack.c.0.s8 %v1078
      %v1080 = vlaneseq
      %v1081 = vshrl.u32 %v1080, 7
      %v1082 = vsub.s32 %v1079, %v1081
      %v1083 = vrot.slane %v1066, %v1082
      %v1085 = vunpack.c.l.s4 1983009808
      %v1086 = vunpack.c.0.s8 %v1085
      %v1087 = vlaneseq
      %v1088 = vshrl.u32 %v1087, 7
      %v1089 = vsub.s32 %v1086, %v1088
      %v1090 = vrot.slane %v1076, %v1089
      %v1091 = vcombine.high %v1083, %v1083
      %1092 = vrot.lane.b32.xlu0 %v1083, 91
      %v1093 = vpop.permute.xlu0 %1092
      %1094 = vrot.lane.b32.xlu0 %v1091, 91
      %v1095 = vpop.permute.xlu0 %1094
      %1096 = vrot.lane.b32.xlu0 %v1090, 91
      %v1097 = vpop.permute.xlu0 %1096
      %vm1098 = vcmask 744448
      %v1099 = vsel %vm1098, %v1093, %v1095
      %v1100 = vsel %vm1098, %v1095, %v1097
      %v1102 = vsel %vm182, %v1074, 0
      %v1105 = vsel %vm186, %v1099, 0
      %v1108 = vsel %vm186, %v1100, 0
      %v1111 = vsel %vm186, %v1097, 0
      %1113 = vmatprep.subr.bf16.mxu0 %v1108
      %1114 = vmatpush1.bf16.msra.mxu0 %v1105
      %1115 = vmatprep.subr.bf16.mxu0 0
      %1116 = vmatpush1.bf16.msra.mxu0 0
      %1117 = vmatprep.subr.bf16.mxu0 0
      %1118 = vmatpush1.bf16.msra.mxu0 0
      %1119 = vmatprep.subr.bf16.mxu0 0
      %1120 = vmatpush1.bf16.msra.mxu0 0
      %1121 = vmatprep.subr.bf16.mxu0 0
      %1122 = vmatpush1.bf16.msra.mxu0 0
      %1123 = vmatprep.subr.bf16.mxu0 0
      %1124 = vmatpush1.bf16.msra.mxu0 0
      %1125 = vmatprep.subr.bf16.mxu0 0
      %1126 = vmatpush1.bf16.msra.mxu0 0
      %1127 = vmatprep.subr.bf16.mxu0 0
      %1128 = vmatpush1.bf16.msra.mxu0 0
      %1129 = vmatprep.subr.bf16.mxu0 0
      %1130 = vmatpush1.bf16.msra.mxu0 0
      %1131 = vmatprep.subr.bf16.mxu0 0
      %1132 = vmatpush1.bf16.msra.mxu0 0
      %1133 = vmatprep.subr.bf16.mxu0 0
      %1134 = vmatpush1.bf16.msra.mxu0 0
      %1135 = vmatprep.subr.bf16.mxu0 0
      %1136 = vmatpush1.bf16.msra.mxu0 0
      %1137 = vmatprep.subr.bf16.mxu0 0
      %1138 = vmatpush1.bf16.msra.mxu0 0
      %1139 = vmatprep.subr.bf16.mxu0 0
      %1140 = vmatpush1.bf16.msra.mxu0 0
      %1141 = vmatprep.subr.bf16.mxu0 0
      %1142 = vmatpush1.bf16.msra.mxu0 0
      %1143 = vmatprep.subr.bf16.mxu0 0
      %1144 = vmatpush1.bf16.msra.mxu0 0
      %1145 = vmatprep.mubr.bf16.mxu0 0
      %1146 = vmatmul.mubr.bf16.gmra.mrb[0].mxu0 %v1102
      %v1147 = vpop.f32.mrb[0].mxu0
      %v1148 = vadd.f32 0.0, %v1147
      %v1149 = vpop.f32.mrb[0].mxu0
      %v1150 = vadd.f32 0.0, %v1149
      %v1151 = vpop.f32.mrb[0].mxu0
      %v1152 = vadd.f32 0.0, %v1151
      %v1153 = vpop.f32.mrb[0].mxu0
      %v1154 = vadd.f32 0.0, %v1153
      %1155 = vdwg.mxu0
      %1156 = vmatprep.subr.bf16.mxu0 0
      %1157 = vmatpush1.bf16.msra.mxu0 %v1111
      %1158 = vmatprep.subr.bf16.mxu0 0
      %1159 = vmatpush1.bf16.msra.mxu0 0
      %1160 = vmatprep.subr.bf16.mxu0 0
      %1161 = vmatpush1.bf16.msra.mxu0 0
      %1162 = vmatprep.subr.bf16.mxu0 0
      %1163 = vmatpush1.bf16.msra.mxu0 0
      %1164 = vmatprep.subr.bf16.mxu0 0
      %1165 = vmatpush1.bf16.msra.mxu0 0
      %1166 = vmatprep.subr.bf16.mxu0 0
      %1167 = vmatpush1.bf16.msra.mxu0 0
      %1168 = vmatprep.subr.bf16.mxu0 0
      %1169 = vmatpush1.bf16.msra.mxu0 0
      %1170 = vmatprep.subr.bf16.mxu0 0
      %1171 = vmatpush1.bf16.msra.mxu0 0
      %1172 = vmatprep.subr.bf16.mxu0 0
      %1173 = vmatpush1.bf16.msra.mxu0 0
      %1174 = vmatprep.subr.bf16.mxu0 0
      %1175 = vmatpush1.bf16.msra.mxu0 0
      %1176 = vmatprep.subr.bf16.mxu0 0
      %1177 = vmatpush1.bf16.msra.mxu0 0
      %1178 = vmatprep.subr.bf16.mxu0 0
      %1179 = vmatpush1.bf16.msra.mxu0 0
      %1180 = vmatprep.subr.bf16.mxu0 0
      %1181 = vmatpush1.bf16.msra.mxu0 0
      %1182 = vmatprep.subr.bf16.mxu0 0
      %1183 = vmatpush1.bf16.msra.mxu0 0
      %1184 = vmatprep.subr.bf16.mxu0 0
      %1185 = vmatpush1.bf16.msra.mxu0 0
      %1186 = vmatprep.subr.bf16.mxu0 0
      %1187 = vmatpush1.bf16.msra.mxu0 0
      %1188 = vmatprep.mubr.bf16.mxu0 0
      %1189 = vmatmul.mubr.bf16.gmra.mrb[0].mxu0 %v1102
      %v1190 = vpop.f32.mrb[0].mxu0
      %v1191 = vadd.f32 0.0, %v1190
      %v1192 = vpop.f32.mrb[0].mxu0
      %v1193 = vpop.f32.mrb[0].mxu0
      %v1194 = vadd.f32 0.0, %v1193
      %v1195 = vpop.f32.mrb[0].mxu0
      %1196 = vdwg.mxu0
      %v1197 = vadd.f32 %v1060, %v1148
      %v1198 = vadd.f32 %v1061, %v1150
      %v1199 = vadd.f32 %v1062, %v1191
      %v1200 = vadd.f32 %v1063, %v1152
      %v1201 = vadd.f32 %v1064, %v1154
      %v1202 = vadd.f32 %v1065, %v1194
      %v1203 = vld [vmem:[%s138] sm:$0x3f]
      %s1204 = scalar_lea.vmem %s1, 64
      %v1205 = vld [vmem:[%s1204] sm:$0xf]
      %v1206 = vld [vmem:[%s1204 + $0x4] sm:$0xf]
      %v1209 = vunpack.c.l.b16 %v1205
      %v1210 = vunpack.c.l.b16 %v1206
      %v1211 = vpack.c.b16 %v1210, %v1209
      %v1213 = vcombine.high %v1203, %v1203
      %v1215 = vunpack.c.l.s4 1983009808
      %v1216 = vunpack.c.0.s8 %v1215
      %v1217 = vlaneseq
      %v1218 = vshrl.u32 %v1217, 7
      %v1219 = vsub.s32 %v1216, %v1218
      %v1220 = vrot.slane %v1203, %v1219
      %v1222 = vunpack.c.l.s4 1983009808
      %v1223 = vunpack.c.0.s8 %v1222
      %v1224 = vlaneseq
      %v1225 = vshrl.u32 %v1224, 7
      %v1226 = vsub.s32 %v1223, %v1225
      %v1227 = vrot.slane %v1213, %v1226
      %v1228 = vcombine.high %v1220, %v1220
      %1229 = vrot.lane.b32.xlu0 %v1220, 90
      %v1230 = vpop.permute.xlu0 %1229
      %1231 = vrot.lane.b32.xlu0 %v1228, 90
      %v1232 = vpop.permute.xlu0 %1231
      %1233 = vrot.lane.b32.xlu0 %v1227, 90
      %v1234 = vpop.permute.xlu0 %1233
      %vm1235 = vcmask 736256
      %v1236 = vsel %vm1235, %v1230, %v1232
      %v1237 = vsel %vm1235, %v1232, %v1234
      %v1239 = vsel %vm182, %v1211, 0
      %v1242 = vsel %vm186, %v1236, 0
      %v1245 = vsel %vm186, %v1237, 0
      %v1248 = vsel %vm186, %v1234, 0
      %1250 = vmatprep.subr.bf16.mxu0 %v1245
      %1251 = vmatpush1.bf16.msra.mxu0 %v1242
      %1252 = vmatprep.subr.bf16.mxu0 0
      %1253 = vmatpush1.bf16.msra.mxu0 0
      %1254 = vmatprep.subr.bf16.mxu0 0
      %1255 = vmatpush1.bf16.msra.mxu0 0
      %1256 = vmatprep.subr.bf16.mxu0 0
      %1257 = vmatpush1.bf16.msra.mxu0 0
      %1258 = vmatprep.subr.bf16.mxu0 0
      %1259 = vmatpush1.bf16.msra.mxu0 0
      %1260 = vmatprep.subr.bf16.mxu0 0
      %1261 = vmatpush1.bf16.msra.mxu0 0
      %1262 = vmatprep.subr.bf16.mxu0 0
      %1263 = vmatpush1.bf16.msra.mxu0 0
      %1264 = vmatprep.subr.bf16.mxu0 0
      %1265 = vmatpush1.bf16.msra.mxu0 0
      %1266 = vmatprep.subr.bf16.mxu0 0
      %1267 = vmatpush1.bf16.msra.mxu0 0
      %1268 = vmatprep.subr.bf16.mxu0 0
      %1269 = vmatpush1.bf16.msra.mxu0 0
      %1270 = vmatprep.subr.bf16.mxu0 0
      %1271 = vmatpush1.bf16.msra.mxu0 0
      %1272 = vmatprep.subr.bf16.mxu0 0
      %1273 = vmatpush1.bf16.msra.mxu0 0
      %1274 = vmatprep.subr.bf16.mxu0 0
      %1275 = vmatpush1.bf16.msra.mxu0 0
      %1276 = vmatprep.subr.bf16.mxu0 0
      %1277 = vmatpush1.bf16.msra.mxu0 0
      %1278 = vmatprep.subr.bf16.mxu0 0
      %1279 = vmatpush1.bf16.msra.mxu0 0
      %1280 = vmatprep.subr.bf16.mxu0 0
      %1281 = vmatpush1.bf16.msra.mxu0 0
      %1282 = vmatprep.mubr.bf16.mxu0 0
      %1283 = vmatmul.mubr.bf16.gmra.mrb[0].mxu0 %v1239
      %v1284 = vpop.f32.mrb[0].mxu0
      %v1285 = vadd.f32 0.0, %v1284
      %v1286 = vpop.f32.mrb[0].mxu0
      %v1287 = vadd.f32 0.0, %v1286
      %v1288 = vpop.f32.mrb[0].mxu0
      %v1289 = vadd.f32 0.0, %v1288
      %v1290 = vpop.f32.mrb[0].mxu0
      %v1291 = vadd.f32 0.0, %v1290
      %1292 = vdwg.mxu0
      %1293 = vmatprep.subr.bf16.mxu0 0
      %1294 = vmatpush1.bf16.msra.mxu0 %v1248
      %1295 = vmatprep.subr.bf16.mxu0 0
      %1296 = vmatpush1.bf16.msra.mxu0 0
      %1297 = vmatprep.subr.bf16.mxu0 0
      %1298 = vmatpush1.bf16.msra.mxu0 0
      %1299 = vmatprep.subr.bf16.mxu0 0
      %1300 = vmatpush1.bf16.msra.mxu0 0
      %1301 = vmatprep.subr.bf16.mxu0 0
      %1302 = vmatpush1.bf16.msra.mxu0 0
      %1303 = vmatprep.subr.bf16.mxu0 0
      %1304 = vmatpush1.bf16.msra.mxu0 0
      %1305 = vmatprep.subr.bf16.mxu0 0
      %1306 = vmatpush1.bf16.msra.mxu0 0
      %1307 = vmatprep.subr.bf16.mxu0 0
      %1308 = vmatpush1.bf16.msra.mxu0 0
      %1309 = vmatprep.subr.bf16.mxu0 0
      %1310 = vmatpush1.bf16.msra.mxu0 0
      %1311 = vmatprep.subr.bf16.mxu0 0
      %1312 = vmatpush1.bf16.msra.mxu0 0
      %1313 = vmatprep.subr.bf16.mxu0 0
      %1314 = vmatpush1.bf16.msra.mxu0 0
      %1315 = vmatprep.subr.bf16.mxu0 0
      %1316 = vmatpush1.bf16.msra.mxu0 0
      %1317 = vmatprep.subr.bf16.mxu0 0
      %1318 = vmatpush1.bf16.msra.mxu0 0
      %1319 = vmatprep.subr.bf16.mxu0 0
      %1320 = vmatpush1.bf16.msra.mxu0 0
      %1321 = vmatprep.subr.bf16.mxu0 0
      %1322 = vmatpush1.bf16.msra.mxu0 0
      %1323 = vmatprep.subr.bf16.mxu0 0
      %1324 = vmatpush1.bf16.msra.mxu0 0
      %1325 = vmatprep.mubr.bf16.mxu0 0
      %1326 = vmatmul.mubr.bf16.gmra.mrb[0].mxu0 %v1239
      %v1327 = vpop.f32.mrb[0].mxu0
      %v1328 = vadd.f32 0.0, %v1327
      %v1329 = vpop.f32.mrb[0].mxu0
      %v1330 = vpop.f32.mrb[0].mxu0
      %v1331 = vadd.f32 0.0, %v1330
      %v1332 = vpop.f32.mrb[0].mxu0
      %1333 = vdwg.mxu0
      %v1334 = vadd.f32 %v1197, %v1285
      %v1335 = vadd.f32 %v1198, %v1287
      %v1336 = vadd.f32 %v1199, %v1328
      %v1337 = vadd.f32 %v1200, %v1289
      %v1338 = vadd.f32 %v1201, %v1291
      %v1339 = vadd.f32 %v1202, %v1331
      %v1340 = vxor.u32 %v1337, 2147483648
      %v1341 = vxor.u32 %v1338, 2147483648
      %v1342 = vxor.u32 %v1339, 2147483648
      %v1343 = vmul.f32 %v1340, 1.442695
      %v1344 = vpow.pop %v1343
      %v1345 = vmul.f32 %v1341, 1.442695
      %v1346 = vpow.pop %v1345
      %v1347 = vmul.f32 %v1342, 1.442695
      %v1348 = vpow.pop %v1347
      %v1349 = vadd.f32 %v1344, 1.0
      %v1350 = vadd.f32 %v1346, 1.0
      %v1351 = vadd.f32 %v1348, 1.0
      %v1352 = vrcp.pop %v1349
      %v1353 = vmul.f32 1.0, %v1352
      %v1354 = vrcp.pop %v1350
      %v1355 = vmul.f32 1.0, %v1354
      %v1356 = vrcp.pop %v1351
      %v1357 = vmul.f32 1.0, %v1356
      %v1358 = vmax.f32 %v1334, 0.0
      %v1359 = vmax.f32 %v1335, 0.0
      %v1360 = vmax.f32 %v1336, 0.0
      %v1361 = vmul.f32 %v1353, %v1358
      %v1362 = vmul.f32 %v1355, %v1359
      %v1363 = vmul.f32 %v1357, %v1360
      %1364 = vst [vmem:[%s143] sm:$0xff] %v1361
      %1365 = vst [vmem:[%s143 + $0x8] sm:$0xff] %v1362
      %vm1366 = vcmask 261120
      %1367 = vst.msk [vmem:[%s143 + $0x10] sm:$0xff] %vm1366, %v1363
      %p1368 = scmp.lt.s32.totalorder %s13, 1
      %s1369 = scalar_select %p1368, %s13, 1
      %s1370 = smul.addr %s1369, 3
      %s1371 = smul.addr %s1370, 8
      %s1372 = scalar_lea.vmem %s2, %s1371
      // Predicated region
      $region29: #{gated_convolution_2d.1} parent=27 // pred_check
        %p1373 = pneg %p78
      $region30: #{gated_convolution_2d.1} parent=27 // pred_check_branch
        %1375 = sbr.rel (%p1373) target = $region32
      $region31: #{gated_convolution_2d.1} parent=27 // pred_region
        _
      $region32: #{gated_convolution_2d.1} parent=27 // pred_fallthru
        _
    $region28: #{gated_convolution_2d.1} parent=5 // pred_fallthru
      _
    %p1376 = scmp.le.s32.totalorder 2, %s8
    // Predicated region
    $region33: #{gated_convolution_2d.1} parent=5 // pred_check
      %p1377 = pneg %p1376
    $region34: #{gated_convolution_2d.1} parent=5 // pred_check_branch
      %1379 = sbr.rel (%p1377) target = $region36
    $region35: #{gated_convolution_2d.1} parent=5 // pred_region
      %s1380 = ssub.s32 %s8, 2
      // Predicated region
      $region37: #{gated_convolution_2d.1} parent=35 // pred_check
        %p1381 = pneg %p84
      $region38: #{gated_convolution_2d.1} parent=35 // pred_check_branch
        %1383 = sbr.rel (%p1381) target = $region40
      $region39: #{gated_convolution_2d.1} parent=35 // pred_region
        %p1384 = scmp.lt.s32.totalorder %s14, 1
        %s1385 = scalar_select %p1384, %s14, 1
        %s1386 = smul.addr %s1385, 3
        %s1387 = smul.addr %s1386, 8
        %s1388 = scalar_lea.vmem %s2, %s1387
      $region40: #{gated_convolution_2d.1} parent=35 // pred_fallthru
        _
    $region36: #{gated_convolution_2d.1} parent=5 // pred_fallthru
      _
  $region6: #{gated_convolution_2d.1} parent=0 // loop_footer
    %s12 = sadd.s32 1, %s8
  $region7: #{gated_convolution_2d.1} parent=0 // loop_footer_branch
    %7 = sbr.rel target = $region3
  $region8: #{gated_convolution_2d.1} parent=0 // loop_exit
    _

</llo_original>
